<compile_context>
chip_gen: v6e
topology: v6e:2x2x1
jax: 0.10.0
libtpu: 0.0.40
codegen_flags: <defaults>
</compile_context>

<pallas_src>
import functools
import math

import jax
import jax.numpy as jnp
from jax.experimental import pallas as pl
from jax.experimental.pallas import tpu as pltpu


def _round_up(v, m):
    return ((v + m - 1) // m) * m


def _choose_tiles(n, tm, tk):
    """Pick tile sizes (multiples of 16 for bf16 packing) and padded N."""
    n16 = _round_up(n, 16)
    tk = max(16, (min(tk, n16) // 16) * 16)
    n_pad = _round_up(n16, tk)
    tm = max(16, (min(tm, n_pad) // 16) * 16)
    if n_pad % tm:
        # Defensive fallback for odd tile choices: gcd of two multiples of 16
        # is a multiple of 16 and divides n_pad.  (Not hit with the defaults.)
        tm = math.gcd(n_pad, tm)
    return n_pad, tm, tk


# --------------------------------------------------------------------------- #
# Kernel 1: layer-1 normalized aggregation + W1/b1/relu + W2 projection, with
# the layer-2 column normalization folded into the stored intermediate:
#   hw[i,:] = d_i * ( relu( d_i * (sum_k A[i,k] @ xs[k]) @ W1 + b1 ) @ W2 )
# where xs = d^{-1/2} * X was pre-scaled (and pre-cast to bf16) in the wrapper.
# --------------------------------------------------------------------------- #
def layer1_kernel(a_ref, di_ref, xs_ref, w1_ref, b1_ref, w2_ref,
                  hw_ref, acc_ref, *, tk, xs_resident):
    k = pl.program_id(1)

    @pl.when(k == 0)
    def _():
        acc_ref[...] = jnp.zeros_like(acc_ref)

    if xs_resident:
        start = pl.multiple_of(k * tk, tk)
        xs = xs_ref[pl.ds(start, tk), :]                          # (TK, F) bf16
    else:
        xs = xs_ref[...]                                          # (TK, F) bf16
    acc_ref[...] += jnp.dot(a_ref[...], xs,
                            preferred_element_type=jnp.float32)   # (TM, F) f32

    @pl.when(k == pl.num_programs(1) - 1)
    def _():
        di = di_ref[...]                                          # (TM, 1) f32
        # Layer-1 row normalization, then W1 / bias / relu.
        agg = (di * acc_ref[...]).astype(jnp.bfloat16)            # (TM, F)
        h = jnp.dot(agg, w1_ref[...],
                    preferred_element_type=jnp.float32) + b1_ref[...]
        h = jnp.maximum(h, 0.0).astype(jnp.bfloat16)              # (TM, H)
        # Fused layer-2 projection; fold layer-2 column norm (d_i) in here so
        # kernel 2 never touches d_k, and store bf16 (halves hw HBM bytes).
        hw = jnp.dot(h, w2_ref[...],
                     preferred_element_type=jnp.float32)          # (TM, CP)
        hw_ref[...] = (di * hw).astype(jnp.bfloat16)


# --------------------------------------------------------------------------- #
# Kernel 2: layer-2 normalized aggregation + bias
#   out[i,:] = d_i * (sum_k A[i,k] @ hw[k]) + b2_pad
# --------------------------------------------------------------------------- #
def layer2_kernel(a_ref, di_ref, hw_ref, b2_ref, o_ref, acc_ref,
                  *, tk, hw_resident):
    k = pl.program_id(1)

    @pl.when(k == 0)
    def _():
        acc_ref[...] = jnp.zeros_like(acc_ref)

    if hw_resident:
        start = pl.multiple_of(k * tk, tk)
        hs = hw_ref[pl.ds(start, tk), :]                          # (TK, CP) bf16
    else:
        hs = hw_ref[...]                                          # (TK, CP) bf16
    acc_ref[...] += jnp.dot(a_ref[...], hs,
                            preferred_element_type=jnp.float32)   # (TM, CP) f32

    @pl.when(k == pl.num_programs(1) - 1)
    def _():
        o_ref[...] = di_ref[...] * acc_ref[...] + b2_ref[...]


def gcn_forward(adj, x, w1, b1, w2, b2, *, tm=512, tk=1024,
                resident_budget=8 << 20):
    n, f = x.shape
    hdim = w1.shape[1]
    c = w2.shape[1]
    cp = max(128, _round_up(c, 128))            # lane-dense padded class dim

    n_pad, tm, tk = _choose_tiles(n, tm, tk)
    grid = (n_pad // tm, n_pad // tk)           # (row tiles, reduction tiles)

    # Symmetric GCN normalization factor (degrees clamped to >= 1).  If the
    # graph is reused across forward calls, hoist this block + the bf16 cast.
    deg = jnp.maximum(
        jnp.sum(adj.astype(jnp.float32), axis=1, keepdims=True), 1.0)
    dis = jax.lax.rsqrt(deg)                                      # (N, 1) f32

    # Pre-scale + pre-cast the node features once (folds the layer-1 column
    # normalization); adjacency 0/1 values are exact in bf16.
    xs = (dis * x.astype(jnp.float32)).astype(jnp.bfloat16)       # (N, F)
    a_bf = adj.astype(jnp.bfloat16)

    if n_pad != n:
        a_bf = jnp.zeros((n_pad, n_pad), jnp.bfloat16).at[:n, :n].set(a_bf)
        xs = jnp.zeros((n_pad, f), jnp.bfloat16).at[:n, :].set(xs)
        dis = jnp.ones((n_pad, 1), jnp.float32).at[:n, :].set(dis)

    w1_bf = w1.astype(jnp.bfloat16)
    w2_pad = jnp.zeros((hdim, cp), jnp.bfloat16).at[:, :c].set(
        w2.astype(jnp.bfloat16))
    b1_f = b1.reshape(1, hdim).astype(jnp.float32)
    b2_pad = jnp.zeros((1, cp), jnp.float32).at[:, :c].set(
        b2.reshape(1, c).astype(jnp.float32))

    # Keep the small matrices VMEM-resident when they fit the budget; otherwise
    # stream them per reduction tile.
    xs_bytes = n_pad * f * 2
    hw_bytes = n_pad * cp * 2
    xs_resident = xs_bytes <= resident_budget
    hw_resident = hw_bytes <= resident_budget

    # Explicit scoped-VMEM limit: above v5e's 16 MiB default, below ~48 MiB to
    # leave headroom under v7x's 64 MiB physical VMEM.
    def _vmem_limit(need_bytes):
        return int(min(max(int(1.5 * need_bytes) + (8 << 20), 32 << 20),
                       48 << 20))

    l1_need = (2 * tm * tk * 2
               + (2 * xs_bytes if xs_resident else 2 * tk * f * 2)
               + 2 * (f * hdim * 2 + hdim * cp * 2 + hdim * 4 + tm * 4)
               + 2 * tm * cp * 2                     # hw output (bf16, dbuf)
               + tm * f * 4)                         # accumulator
    l2_need = (2 * tm * tk * 2
               + (2 * hw_bytes if hw_resident else 2 * tk * cp * 2)
               + 2 * (cp * 4 + tm * 4)
               + 2 * tm * cp * 4                     # output (f32, dbuf)
               + tm * cp * 4)                        # accumulator

    cparams1 = pltpu.CompilerParams(
        dimension_semantics=("parallel", "arbitrary"),
        vmem_limit_bytes=_vmem_limit(l1_need))
    cparams2 = pltpu.CompilerParams(
        dimension_semantics=("parallel", "arbitrary"),
        vmem_limit_bytes=_vmem_limit(l2_need))

    xs_spec = (pl.BlockSpec((n_pad, f), lambda i, k: (0, 0)) if xs_resident
               else pl.BlockSpec((tk, f), lambda i, k: (k, 0)))
    hw_spec = (pl.BlockSpec((n_pad, cp), lambda i, k: (0, 0)) if hw_resident
               else pl.BlockSpec((tk, cp), lambda i, k: (k, 0)))

    # ---- layer 1 aggregation + W1/b1/relu + fused W2 projection ----------- #
    hw = pl.pallas_call(
        functools.partial(layer1_kernel, tk=tk, xs_resident=xs_resident),
        out_shape=jax.ShapeDtypeStruct((n_pad, cp), jnp.bfloat16),
        grid_spec=pltpu.PrefetchScalarGridSpec(
            num_scalar_prefetch=0,
            grid=grid,
            in_specs=[
                pl.BlockSpec((tm, tk), lambda i, k: (i, k)),    # A
                pl.BlockSpec((tm, 1), lambda i, k: (i, 0)),     # d_i (rows)
                xs_spec,                                        # pre-scaled X
                pl.BlockSpec((f, hdim), lambda i, k: (0, 0)),   # W1
                pl.BlockSpec((1, hdim), lambda i, k: (0, 0)),   # b1
                pl.BlockSpec((hdim, cp), lambda i, k: (0, 0)),  # W2 (padded)
            ],
            out_specs=pl.BlockSpec((tm, cp), lambda i, k: (i, 0)),
            scratch_shapes=[pltpu.VMEM((tm, f), jnp.float32)],
        ),
        compiler_params=cparams1,
    )(a_bf, dis, xs, w1_bf, b1_f, w2_pad)

    # ---- layer 2 aggregation + bias ---------------------------------------- #
    out = pl.pallas_call(
        functools.partial(layer2_kernel, tk=tk, hw_resident=hw_resident),
        out_shape=jax.ShapeDtypeStruct((n_pad, cp), jnp.float32),
        grid_spec=pltpu.PrefetchScalarGridSpec(
            num_scalar_prefetch=0,
            grid=grid,
            in_specs=[
                pl.BlockSpec((tm, tk), lambda i, k: (i, k)),    # A
                pl.BlockSpec((tm, 1), lambda i, k: (i, 0)),     # d_i (rows)
                hw_spec,                                        # hw (col-norm folded)
                pl.BlockSpec((1, cp), lambda i, k: (0, 0)),     # b2 (padded)
            ],
            out_specs=pl.BlockSpec((tm, cp), lambda i, k: (i, 0)),
            scratch_shapes=[pltpu.VMEM((tm, cp), jnp.float32)],
        ),
        compiler_params=cparams2,
    )(a_bf, dis, hw, b2_pad)

    return out[:n, :c]


# --------------------------------------------------------------------------- #
# Pure-JAX f32 reference and a small deterministic test problem
# --------------------------------------------------------------------------- #
def gcn_reference(adj, x, w1, b1, w2, b2):
    deg = jnp.maximum(adj.sum(axis=1, keepdims=True), 1.0)
    dis = 1.0 / jnp.sqrt(deg)
    a_hat = dis * adj * dis.T
    h = jnp.maximum(a_hat @ (x @ w1) + b1, 0.0)
    return a_hat @ (h @ w2) + b2


def _glorot(key, shape):
    fan_in, fan_out = shape
    limit = (6.0 / (fan_in + fan_out)) ** 0.5
    return jax.random.uniform(key, shape, jnp.float32, -limit, limit)


if __name__ == "__main__":
    # Small but tiling-exercising problem: N=256 nodes, in_feats=16,
    # hidden=32, classes=8 (padded to lane-dense 128 inside the kernel).
    N, IN_FEATS, HIDDEN, NUM_CLASSES = 256, 16, 32, 8

    key = jax.random.PRNGKey(0)
    k_adj, k_x, k_w1, k_w2 = jax.random.split(key, 4)

    # Random symmetric adjacency (undirected graph), no self-loops.
    upper = (jax.random.uniform(k_adj, (N, N)) < 0.1).astype(jnp.float32)
    upper = jnp.triu(upper, k=1)
    adj = upper + upper.T                                     # (N, N) float32

    x = jax.random.normal(k_x, (N, IN_FEATS), jnp.float32)    # node features

    # Deterministic glorot-style parameter init (DGL GraphConv uses xavier).
    w1 = _glorot(k_w1, (IN_FEATS, HIDDEN))
    b1 = jnp.zeros((1, HIDDEN), jnp.float32)
    w2 = _glorot(k_w2, (HIDDEN, NUM_CLASSES))
    b2 = jnp.zeros((1, NUM_CLASSES), jnp.float32)

    out = gcn_forward(adj, x, w1, b1, w2, b2)
    out = jax.block_until_ready(out)

    ref = gcn_reference(adj, x, w1, b1, w2, b2)
    assert out.shape == (N, NUM_CLASSES)
    # bf16 MXU operands / bf16 intermediate with f32 accumulation -> loose
    # tolerance vs the f32 reference.
    assert jnp.allclose(out, ref, atol=3e-2, rtol=3e-2), \
        f"max abs err {jnp.max(jnp.abs(out - ref))}"

    print("KERNEL_OK")
</pallas_src>

<mosaic_0001>
module attributes {stable_mosaic.version = 11 : i64} {
  func.func @layer1_kernel(%arg0: i32, %arg1: i32, %arg2: memref<256x256xbf16, #tpu.memory_space<vmem>>, %arg3: memref<256x1xf32, #tpu.memory_space<vmem>>, %arg4: memref<256x16xbf16, #tpu.memory_space<vmem>>, %arg5: memref<16x32xbf16, #tpu.memory_space<vmem>>, %arg6: memref<1x32xf32, #tpu.memory_space<vmem>>, %arg7: memref<32x128xbf16, #tpu.memory_space<vmem>>, %arg8: memref<256x128xbf16, #tpu.memory_space<vmem>>, %arg9: memref<256x16xf32, #tpu.memory_space<vmem>>) attributes {dimension_semantics = [#tpu.dimension_semantics<parallel>, #tpu.dimension_semantics<arbitrary>], iteration_bounds = array<i64: 1, 1>, scalar_prefetch = 0 : i64, scratch_operands = 1 : i64, tpu.core_type = #tpu.core_type<tc>, window_params = [{transform_indices = @transform_0, window_bounds = array<i64: 256, 256>}, {transform_indices = @transform_1, window_bounds = array<i64: 256, 1>}, {pipeline_mode = #tpu.pipeline_mode<synchronous>, transform_indices = @transform_2, window_bounds = array<i64: 256, 16>}, {pipeline_mode = #tpu.pipeline_mode<synchronous>, transform_indices = @transform_3, window_bounds = array<i64: 16, 32>}, {pipeline_mode = #tpu.pipeline_mode<synchronous>, transform_indices = @transform_4, window_bounds = array<i64: 1, 32>}, {pipeline_mode = #tpu.pipeline_mode<synchronous>, transform_indices = @transform_5, window_bounds = array<i64: 32, 128>}, {transform_indices = @transform_6, window_bounds = array<i64: 256, 128>}]} {
    %c0_i32 = arith.constant 0 : i32
    %0 = arith.cmpi eq, %arg1, %c0_i32 : i32
    %1 = arith.extui %0 : i1 to i32
    %c0_i32_0 = arith.constant 0 : i32
    %2 = arith.cmpi ne, %1, %c0_i32_0 : i32
    scf.if %2 {
      %cst_9 = arith.constant 0.000000e+00 : f32
      %15 = vector.broadcast %cst_9 : f32 to vector<256x16xf32>
      %c0_10 = arith.constant 0 : index
      %c0_11 = arith.constant 0 : index
      %16 = vector.load %arg9[%c0_10, %c0_11] : memref<256x16xf32, #tpu.memory_space<vmem>>, vector<256x16xf32>
      tpu.vector_store %arg9[%c0_10, %c0_11], %15 {strides = array<i32>} : memref<256x16xf32, #tpu.memory_space<vmem>>, vector<256x16xf32>,
    } else {
    }
    %c256_i32 = arith.constant 256 : i32
    %3 = arith.muli %arg1, %c256_i32 : i32
    %4 = tpu.assume_multiple %3, 256 : i32
    %5 = arith.index_cast %4 : i32 to index
    %c0 = arith.constant 0 : index
    %6 = vector.load %arg4[%5, %c0] : memref<256x16xbf16, #tpu.memory_space<vmem>>, vector<256x16xbf16>
    %c0_1 = arith.constant 0 : index
    %c0_2 = arith.constant 0 : index
    %7 = vector.load %arg9[%c0_1, %c0_2] : memref<256x16xf32, #tpu.memory_space<vmem>>, vector<256x16xf32>
    %c0_3 = arith.constant 0 : index
    %c0_4 = arith.constant 0 : index
    %8 = vector.load %arg2[%c0_3, %c0_4] : memref<256x256xbf16, #tpu.memory_space<vmem>>, vector<256x256xbf16>
    %cst = arith.constant dense<0.000000e+00> : vector<256x16xf32>
    %9 = tpu.matmul %8, %6, %cst {dimension_numbers = #tpu.dot_dimension_numbers<[1], [0], [0], [1], [0, 0, 1, 1], [], []>} : vector<256x256xbf16>, vector<256x16xbf16>, vector<256x16xf32> -> vector<256x16xf32>
    %10 = arith.addf %7, %9 : vector<256x16xf32>
    %c0_5 = arith.constant 0 : index
    %c0_6 = arith.constant 0 : index
    %11 = vector.load %arg9[%c0_5, %c0_6] : memref<256x16xf32, #tpu.memory_space<vmem>>, vector<256x16xf32>
    tpu.vector_store %arg9[%c0_5, %c0_6], %10 {strides = array<i32>} : memref<256x16xf32, #tpu.memory_space<vmem>>, vector<256x16xf32>,
    %c0_i32_7 = arith.constant 0 : i32
    %12 = arith.cmpi eq, %arg1, %c0_i32_7 : i32
    %13 = arith.extui %12 : i1 to i32
    %c0_i32_8 = arith.constant 0 : i32
    %14 = arith.cmpi ne, %13, %c0_i32_8 : i32
    scf.if %14 {
      %c0_9 = arith.constant 0 : index
      %c0_10 = arith.constant 0 : index
      %15 = vector.load %arg3[%c0_9, %c0_10] : memref<256x1xf32, #tpu.memory_space<vmem>>, vector<256x1xf32>
      %c0_11 = arith.constant 0 : index
      %c0_12 = arith.constant 0 : index
      %16 = vector.load %arg9[%c0_11, %c0_12] : memref<256x16xf32, #tpu.memory_space<vmem>>, vector<256x16xf32>
      %17 = vector.broadcast %15 : vector<256x1xf32> to vector<256x16xf32>
      %18 = arith.mulf %17, %16 : vector<256x16xf32>
      %19 = arith.truncf %18 : vector<256x16xf32> to vector<256x16xbf16>
      %c0_13 = arith.constant 0 : index
      %c0_14 = arith.constant 0 : index
      %20 = vector.load %arg5[%c0_13, %c0_14] : memref<16x32xbf16, #tpu.memory_space<vmem>>, vector<16x32xbf16>
      %cst_15 = arith.constant dense<0.000000e+00> : vector<256x32xf32>
      %21 = tpu.matmul %19, %20, %cst_15 {dimension_numbers = #tpu.dot_dimension_numbers<[1], [0], [0], [1], [0, 0, 1, 1], [], []>} : vector<256x16xbf16>, vector<16x32xbf16>, vector<256x32xf32> -> vector<256x32xf32>
      %c0_16 = arith.constant 0 : index
      %c0_17 = arith.constant 0 : index
      %22 = vector.load %arg6[%c0_16, %c0_17] : memref<1x32xf32, #tpu.memory_space<vmem>>, vector<1x32xf32>
      %23 = vector.broadcast %22 : vector<1x32xf32> to vector<256x32xf32>
      %24 = arith.addf %21, %23 : vector<256x32xf32>
      %cst_18 = arith.constant 0.000000e+00 : f32
      %25 = vector.broadcast %cst_18 : f32 to vector<256x32xf32>
      %26 = arith.maximumf %24, %25 : vector<256x32xf32>
      %27 = arith.truncf %26 : vector<256x32xf32> to vector<256x32xbf16>
      %c0_19 = arith.constant 0 : index
      %c0_20 = arith.constant 0 : index
      %28 = vector.load %arg7[%c0_19, %c0_20] : memref<32x128xbf16, #tpu.memory_space<vmem>>, vector<32x128xbf16>
      %cst_21 = arith.constant dense<0.000000e+00> : vector<256x128xf32>
      %29 = tpu.matmul %27, %28, %cst_21 {dimension_numbers = #tpu.dot_dimension_numbers<[1], [0], [0], [1], [0, 0, 1, 1], [], []>} : vector<256x32xbf16>, vector<32x128xbf16>, vector<256x128xf32> -> vector<256x128xf32>
      %30 = vector.broadcast %15 : vector<256x1xf32> to vector<256x128xf32>
      %31 = arith.mulf %30, %29 : vector<256x128xf32>
      %32 = arith.truncf %31 : vector<256x128xf32> to vector<256x128xbf16>
      %c0_22 = arith.constant 0 : index
      %c0_23 = arith.constant 0 : index
      %33 = vector.load %arg8[%c0_22, %c0_23] : memref<256x128xbf16, #tpu.memory_space<vmem>>, vector<256x128xbf16>
      tpu.vector_store %arg8[%c0_22, %c0_23], %32 {strides = array<i32>} : memref<256x128xbf16, #tpu.memory_space<vmem>>, vector<256x128xbf16>,
    } else {
    }
    return
  }
  func.func @transform_0(%arg0: i32, %arg1: i32) -> (i32, i32) {
    %c0_i32 = arith.constant 0 : i32
    return %arg0, %arg1 : i32, i32
  }
  func.func @transform_1(%arg0: i32, %arg1: i32) -> (i32, i32) {
    %c0_i32 = arith.constant 0 : i32
    %c0_i32_0 = arith.constant 0 : i32
    return %arg0, %c0_i32 : i32, i32
  }
  func.func @transform_2(%arg0: i32, %arg1: i32) -> (i32, i32) {
    %c0_i32 = arith.constant 0 : i32
    %c0_i32_0 = arith.constant 0 : i32
    %c0_i32_1 = arith.constant 0 : i32
    return %c0_i32, %c0_i32_0 : i32, i32
  }
  func.func @transform_3(%arg0: i32, %arg1: i32) -> (i32, i32) {
    %c0_i32 = arith.constant 0 : i32
    %c0_i32_0 = arith.constant 0 : i32
    %c0_i32_1 = arith.constant 0 : i32
    return %c0_i32, %c0_i32_0 : i32, i32
  }
  func.func @transform_4(%arg0: i32, %arg1: i32) -> (i32, i32) {
    %c0_i32 = arith.constant 0 : i32
    %c0_i32_0 = arith.constant 0 : i32
    %c0_i32_1 = arith.constant 0 : i32
    return %c0_i32, %c0_i32_0 : i32, i32
  }
  func.func @transform_5(%arg0: i32, %arg1: i32) -> (i32, i32) {
    %c0_i32 = arith.constant 0 : i32
    %c0_i32_0 = arith.constant 0 : i32
    %c0_i32_1 = arith.constant 0 : i32
    return %c0_i32, %c0_i32_0 : i32, i32
  }
  func.func @transform_6(%arg0: i32, %arg1: i32) -> (i32, i32) {
    %c0_i32 = arith.constant 0 : i32
    %c0_i32_0 = arith.constant 0 : i32
    return %arg0, %c0_i32 : i32, i32
  }
}

</mosaic_0001>

<llo_original>
// kernel: tpu_custom_call.1
$region0: #{tpu_custom_call.1}
  #allocation0 [shape = 'u32[]', space=smem, size = 0x4, offset = 0x4, fixed_abs, tag = 'smem constant byte address 0x4 - core index']
  #allocation1 [shape = 'u32[144,128]{1,0:T(1,128)}', space=vmem, size = 0x12000, scoped, tag = 'internal scratch']
  #allocation2 [shape = 'f32[256,16]{1,0:T(8,128)}', space=vmem, size = 0x20000, scoped, tag = 'scratch operand']
  %s0 = inlined_call_operand.vmem [shape: bf16[256,256], index: 0, kind: input, shape index: {}]
  %s1 = inlined_call_operand.vmem [shape: f32[256,1], index: 1, kind: input, shape index: {}]
  %s2 = inlined_call_operand.vmem [shape: bf16[256,16], index: 2, kind: input, shape index: {}]
  %s3 = inlined_call_operand.vmem [shape: bf16[16,32], index: 3, kind: input, shape index: {}]
  %s4 = inlined_call_operand.vmem [shape: f32[1,32], index: 4, kind: input, shape index: {}]
  %s5 = inlined_call_operand.vmem [shape: bf16[32,128], index: 5, kind: input, shape index: {}]
  %s6 = inlined_call_operand.hbm [shape: bf16[256,128], index: 6, kind: output, shape index: {}]
  %s7 = sld [smem:[#allocation0]]
  $region42: #{tpu_custom_call.1} parent=0
    _
  %s9 = ssub.s32 1, %s7
  %s10 = scalar_select 0, %s9, %s7
  $region1: #{tpu_custom_call.1} parent=0
    #allocation3 [shape = 'u8[65536]{0}', space=vmem, size = 0x10000, scoped, tag = 'output window, operand 0, single buffered']
    #allocation4 [shape = 's32[1]{0}', space=sflag, size = 0x4, scoped, tag = 'scoped memory for tpu_custom_call.1']
    %11 = vsyncpa [#allocation4], 0
    // Predicated region
    $region2: #{tpu_custom_call.1} parent=1 // pred_check
      _
    $region3: #{tpu_custom_call.1} parent=1 // pred_check_branch
      %13 = sbr.rel (0) target = $region5
    $region4: #{tpu_custom_call.1} parent=1 // pred_region
      _
    $region5: #{tpu_custom_call.1} parent=1 // pred_fallthru
      _
    // Predicated region
    $region6: #{tpu_custom_call.1} parent=1 // pred_check
      _
    $region7: #{tpu_custom_call.1} parent=1 // pred_check_branch
      %15 = sbr.rel (0) target = $region9
    $region8: #{tpu_custom_call.1} parent=1 // pred_region
      _
    $region9: #{tpu_custom_call.1} parent=1 // pred_fallthru
      _
    // Predicated region
    $region10: #{tpu_custom_call.1} parent=1 // pred_check
      _
    $region11: #{tpu_custom_call.1} parent=1 // pred_check_branch
      %17 = sbr.rel (0) target = $region13
    $region12: #{tpu_custom_call.1} parent=1 // pred_region
      _
    $region13: #{tpu_custom_call.1} parent=1 // pred_fallthru
      _
    // Predicated region
    $region14: #{tpu_custom_call.1} parent=1 // pred_check
      _
    $region15: #{tpu_custom_call.1} parent=1 // pred_check_branch
      %19 = sbr.rel (0) target = $region17
    $region16: #{tpu_custom_call.1} parent=1 // pred_region
      _
    $region17: #{tpu_custom_call.1} parent=1 // pred_fallthru
      _
    // Predicated region
    $region18: #{tpu_custom_call.1} parent=1 // pred_check
      _
    $region19: #{tpu_custom_call.1} parent=1 // pred_check_branch
      %21 = sbr.rel (0) target = $region21
    $region20: #{tpu_custom_call.1} parent=1 // pred_region
      _
    $region21: #{tpu_custom_call.1} parent=1 // pred_fallthru
      _
    // Predicated region
    $region22: #{tpu_custom_call.1} parent=1 // pred_check
      _
    $region23: #{tpu_custom_call.1} parent=1 // pred_check_branch
      %23 = sbr.rel (0) target = $region25
    $region24: #{tpu_custom_call.1} parent=1 // pred_region
      _
    $region25: #{tpu_custom_call.1} parent=1 // pred_fallthru
      _
    %p25 = scmp.eq.s32.totalorder 0, 0
    // Predicated region
    $region26: #{tpu_custom_call.1} parent=1 // pred_check
      %p26 = pneg %p25
    $region27: #{tpu_custom_call.1} parent=1 // pred_check_branch
      %28 = sbr.rel (%p26) target = $region29
    $region28: #{tpu_custom_call.1} parent=1 // pred_region
      %vm29 = vcmask 130048
      %30 = vst.msk [vmem:[#allocation2] sm:$0xff] %vm29, 0.0
      %31 = vst.msk [vmem:[#allocation2 + $0x8] sm:$0xff] %vm29, 0.0
      %32 = vst.msk [vmem:[#allocation2 + $0x10] sm:$0xff] %vm29, 0.0
      %33 = vst.msk [vmem:[#allocation2 + $0x18] sm:$0xff] %vm29, 0.0
      %34 = vst.msk [vmem:[#allocation2 + $0x20] sm:$0xff] %vm29, 0.0
      %35 = vst.msk [vmem:[#allocation2 + $0x28] sm:$0xff] %vm29, 0.0
      %36 = vst.msk [vmem:[#allocation2 + $0x30] sm:$0xff] %vm29, 0.0
      %37 = vst.msk [vmem:[#allocation2 + $0x38] sm:$0xff] %vm29, 0.0
      %38 = vst.msk [vmem:[#allocation2 + $0x40] sm:$0xff] %vm29, 0.0
      %39 = vst.msk [vmem:[#allocation2 + $0x48] sm:$0xff] %vm29, 0.0
      %40 = vst.msk [vmem:[#allocation2 + $0x50] sm:$0xff] %vm29, 0.0
      %41 = vst.msk [vmem:[#allocation2 + $0x58] sm:$0xff] %vm29, 0.0
      %42 = vst.msk [vmem:[#allocation2 + $0x60] sm:$0xff] %vm29, 0.0
      %43 = vst.msk [vmem:[#allocation2 + $0x68] sm:$0xff] %vm29, 0.0
      %44 = vst.msk [vmem:[#allocation2 + $0x70] sm:$0xff] %vm29, 0.0
      %45 = vst.msk [vmem:[#allocation2 + $0x78] sm:$0xff] %vm29, 0.0
      %46 = vst.msk [vmem:[#allocation2 + $0x80] sm:$0xff] %vm29, 0.0
      %47 = vst.msk [vmem:[#allocation2 + $0x88] sm:$0xff] %vm29, 0.0
      %48 = vst.msk [vmem:[#allocation2 + $0x90] sm:$0xff] %vm29, 0.0
      %49 = vst.msk [vmem:[#allocation2 + $0x98] sm:$0xff] %vm29, 0.0
      %50 = vst.msk [vmem:[#allocation2 + $0xa0] sm:$0xff] %vm29, 0.0
      %51 = vst.msk [vmem:[#allocation2 + $0xa8] sm:$0xff] %vm29, 0.0
      %52 = vst.msk [vmem:[#allocation2 + $0xb0] sm:$0xff] %vm29, 0.0
      %53 = vst.msk [vmem:[#allocation2 + $0xb8] sm:$0xff] %vm29, 0.0
      %54 = vst.msk [vmem:[#allocation2 + $0xc0] sm:$0xff] %vm29, 0.0
      %55 = vst.msk [vmem:[#allocation2 + $0xc8] sm:$0xff] %vm29, 0.0
      %56 = vst.msk [vmem:[#allocation2 + $0xd0] sm:$0xff] %vm29, 0.0
      %57 = vst.msk [vmem:[#allocation2 + $0xd8] sm:$0xff] %vm29, 0.0
      %58 = vst.msk [vmem:[#allocation2 + $0xe0] sm:$0xff] %vm29, 0.0
      %59 = vst.msk [vmem:[#allocation2 + $0xe8] sm:$0xff] %vm29, 0.0
      %60 = vst.msk [vmem:[#allocation2 + $0xf0] sm:$0xff] %vm29, 0.0
      %61 = vst.msk [vmem:[#allocation2 + $0xf8] sm:$0xff] %vm29, 0.0
    $region29: #{tpu_custom_call.1} parent=1 // pred_fallthru
      _
    %s62 = smul.u32 0, 256
    %s63 = sshra.s32 %s62, 3
    %s64 = sand.u32 %s62, 7
    %s65 = smul.addr %s63, 4
    %s66 = scalar_lea.vmem %s2, %s65
    %v67 = vld [vmem:[%s66] sm:$0xf]
    %v68 = vld [vmem:[%s66 + $0x4] sm:$0xf]
    %v69 = vld [vmem:[%s66 + $0x8] sm:$0xf]
    %v70 = vld [vmem:[%s66 + $0xc] sm:$0xf]
    %v71 = vld [vmem:[%s66 + $0x10] sm:$0xf]
    %v72 = vld [vmem:[%s66 + $0x14] sm:$0xf]
    %v73 = vld [vmem:[%s66 + $0x18] sm:$0xf]
    %v74 = vld [vmem:[%s66 + $0x1c] sm:$0xf]
    %v75 = vld [vmem:[%s66 + $0x20] sm:$0xf]
    %v76 = vld [vmem:[%s66 + $0x24] sm:$0xf]
    %v77 = vld [vmem:[%s66 + $0x28] sm:$0xf]
    %v78 = vld [vmem:[%s66 + $0x2c] sm:$0xf]
    %v79 = vld [vmem:[%s66 + $0x30] sm:$0xf]
    %v80 = vld [vmem:[%s66 + $0x34] sm:$0xf]
    %v81 = vld [vmem:[%s66 + $0x38] sm:$0xf]
    %v82 = vld [vmem:[%s66 + $0x3c] sm:$0xf]
    %v83 = vld [vmem:[%s66 + $0x40] sm:$0xf]
    %v84 = vld [vmem:[%s66 + $0x44] sm:$0xf]
    %v85 = vld [vmem:[%s66 + $0x48] sm:$0xf]
    %v86 = vld [vmem:[%s66 + $0x4c] sm:$0xf]
    %v87 = vld [vmem:[%s66 + $0x50] sm:$0xf]
    %v88 = vld [vmem:[%s66 + $0x54] sm:$0xf]
    %v89 = vld [vmem:[%s66 + $0x58] sm:$0xf]
    %v90 = vld [vmem:[%s66 + $0x5c] sm:$0xf]
    %v91 = vld [vmem:[%s66 + $0x60] sm:$0xf]
    %v92 = vld [vmem:[%s66 + $0x64] sm:$0xf]
    %v93 = vld [vmem:[%s66 + $0x68] sm:$0xf]
    %v94 = vld [vmem:[%s66 + $0x6c] sm:$0xf]
    %v95 = vld [vmem:[%s66 + $0x70] sm:$0xf]
    %v96 = vld [vmem:[%s66 + $0x74] sm:$0xf]
    %v97 = vld [vmem:[%s66 + $0x78] sm:$0xf]
    %v98 = vld [vmem:[%s66 + $0x7c] sm:$0xf]
    %v99 = vld [vmem:[#allocation2] sm:$0xff]
    %v100 = vld [vmem:[#allocation2 + $0x8] sm:$0xff]
    %v101 = vld [vmem:[#allocation2 + $0x10] sm:$0xff]
    %v102 = vld [vmem:[#allocation2 + $0x18] sm:$0xff]
    %v103 = vld [vmem:[#allocation2 + $0x20] sm:$0xff]
    %v104 = vld [vmem:[#allocation2 + $0x28] sm:$0xff]
    %v105 = vld [vmem:[#allocation2 + $0x30] sm:$0xff]
    %v106 = vld [vmem:[#allocation2 + $0x38] sm:$0xff]
    %v107 = vld [vmem:[#allocation2 + $0x40] sm:$0xff]
    %v108 = vld [vmem:[#allocation2 + $0x48] sm:$0xff]
    %v109 = vld [vmem:[#allocation2 + $0x50] sm:$0xff]
    %v110 = vld [vmem:[#allocation2 + $0x58] sm:$0xff]
    %v111 = vld [vmem:[#allocation2 + $0x60] sm:$0xff]
    %v112 = vld [vmem:[#allocation2 + $0x68] sm:$0xff]
    %v113 = vld [vmem:[#allocation2 + $0x70] sm:$0xff]
    %v114 = vld [vmem:[#allocation2 + $0x78] sm:$0xff]
    %v115 = vld [vmem:[#allocation2 + $0x80] sm:$0xff]
    %v116 = vld [vmem:[#allocation2 + $0x88] sm:$0xff]
    %v117 = vld [vmem:[#allocation2 + $0x90] sm:$0xff]
    %v118 = vld [vmem:[#allocation2 + $0x98] sm:$0xff]
    %v119 = vld [vmem:[#allocation2 + $0xa0] sm:$0xff]
    %v120 = vld [vmem:[#allocation2 + $0xa8] sm:$0xff]
    %v121 = vld [vmem:[#allocation2 + $0xb0] sm:$0xff]
    %v122 = vld [vmem:[#allocation2 + $0xb8] sm:$0xff]
    %v123 = vld [vmem:[#allocation2 + $0xc0] sm:$0xff]
    %v124 = vld [vmem:[#allocation2 + $0xc8] sm:$0xff]
    %v125 = vld [vmem:[#allocation2 + $0xd0] sm:$0xff]
    %v126 = vld [vmem:[#allocation2 + $0xd8] sm:$0xff]
    %v127 = vld [vmem:[#allocation2 + $0xe0] sm:$0xff]
    %v128 = vld [vmem:[#allocation2 + $0xe8] sm:$0xff]
    %v129 = vld [vmem:[#allocation2 + $0xf0] sm:$0xff]
    %v130 = vld [vmem:[#allocation2 + $0xf8] sm:$0xff]
    %v131 = vld [vmem:[%s0] sm:$0xff]
    %v132 = vld [vmem:[%s0 + $0x8] sm:$0xff]
    %v133 = vld [vmem:[%s0 + $0x10] sm:$0xff]
    %v134 = vld [vmem:[%s0 + $0x18] sm:$0xff]
    %v135 = vld [vmem:[%s0 + $0x20] sm:$0xff]
    %v136 = vld [vmem:[%s0 + $0x28] sm:$0xff]
    %v137 = vld [vmem:[%s0 + $0x30] sm:$0xff]
    %v138 = vld [vmem:[%s0 + $0x38] sm:$0xff]
    %v139 = vld [vmem:[%s0 + $0x40] sm:$0xff]
    %v140 = vld [vmem:[%s0 + $0x48] sm:$0xff]
    %v141 = vld [vmem:[%s0 + $0x50] sm:$0xff]
    %v142 = vld [vmem:[%s0 + $0x58] sm:$0xff]
    %v143 = vld [vmem:[%s0 + $0x60] sm:$0xff]
    %v144 = vld [vmem:[%s0 + $0x68] sm:$0xff]
    %v145 = vld [vmem:[%s0 + $0x70] sm:$0xff]
    %v146 = vld [vmem:[%s0 + $0x78] sm:$0xff]
    %v147 = vld [vmem:[%s0 + $0x80] sm:$0xff]
    %v148 = vld [vmem:[%s0 + $0x88] sm:$0xff]
    %v149 = vld [vmem:[%s0 + $0x90] sm:$0xff]
    %v150 = vld [vmem:[%s0 + $0x98] sm:$0xff]
    %v151 = vld [vmem:[%s0 + $0xa0] sm:$0xff]
    %v152 = vld [vmem:[%s0 + $0xa8] sm:$0xff]
    %v153 = vld [vmem:[%s0 + $0xb0] sm:$0xff]
    %v154 = vld [vmem:[%s0 + $0xb8] sm:$0xff]
    %v155 = vld [vmem:[%s0 + $0xc0] sm:$0xff]
    %v156 = vld [vmem:[%s0 + $0xc8] sm:$0xff]
    %v157 = vld [vmem:[%s0 + $0xd0] sm:$0xff]
    %v158 = vld [vmem:[%s0 + $0xd8] sm:$0xff]
    %v159 = vld [vmem:[%s0 + $0xe0] sm:$0xff]
    %v160 = vld [vmem:[%s0 + $0xe8] sm:$0xff]
    %v161 = vld [vmem:[%s0 + $0xf0] sm:$0xff]
    %v162 = vld [vmem:[%s0 + $0xf8] sm:$0xff]
    %v195 = vunpack.c.l.b16 %v131
    %v196 = vunpack.c.h.b16 %v131
    %v197 = vunpack.c.l.b16 %v132
    %v198 = vunpack.c.h.b16 %v132
    %v199 = vunpack.c.l.b16 %v133
    %v200 = vunpack.c.h.b16 %v133
    %v201 = vunpack.c.l.b16 %v134
    %v202 = vunpack.c.h.b16 %v134
    %v203 = vunpack.c.l.b16 %v135
    %v204 = vunpack.c.h.b16 %v135
    %v205 = vunpack.c.l.b16 %v136
    %v206 = vunpack.c.h.b16 %v136
    %v207 = vunpack.c.l.b16 %v137
    %v208 = vunpack.c.h.b16 %v137
    %v209 = vunpack.c.l.b16 %v138
    %v210 = vunpack.c.h.b16 %v138
    %v211 = vunpack.c.l.b16 %v139
    %v212 = vunpack.c.h.b16 %v139
    %v213 = vunpack.c.l.b16 %v140
    %v214 = vunpack.c.h.b16 %v140
    %v215 = vunpack.c.l.b16 %v141
    %v216 = vunpack.c.h.b16 %v141
    %v217 = vunpack.c.l.b16 %v142
    %v218 = vunpack.c.h.b16 %v142
    %v219 = vunpack.c.l.b16 %v143
    %v220 = vunpack.c.h.b16 %v143
    %v221 = vunpack.c.l.b16 %v144
    %v222 = vunpack.c.h.b16 %v144
    %v223 = vunpack.c.l.b16 %v145
    %v224 = vunpack.c.h.b16 %v145
    %v225 = vunpack.c.l.b16 %v146
    %v226 = vunpack.c.h.b16 %v146
    %v227 = vunpack.c.l.b16 %v147
    %v228 = vunpack.c.h.b16 %v147
    %v229 = vunpack.c.l.b16 %v148
    %v230 = vunpack.c.h.b16 %v148
    %v231 = vunpack.c.l.b16 %v149
    %v232 = vunpack.c.h.b16 %v149
    %v233 = vunpack.c.l.b16 %v150
    %v234 = vunpack.c.h.b16 %v150
    %v235 = vunpack.c.l.b16 %v151
    %v236 = vunpack.c.h.b16 %v151
    %v237 = vunpack.c.l.b16 %v152
    %v238 = vunpack.c.h.b16 %v152
    %v239 = vunpack.c.l.b16 %v153
    %v240 = vunpack.c.h.b16 %v153
    %v241 = vunpack.c.l.b16 %v154
    %v242 = vunpack.c.h.b16 %v154
    %v243 = vunpack.c.l.b16 %v155
    %v244 = vunpack.c.h.b16 %v155
    %v245 = vunpack.c.l.b16 %v156
    %v246 = vunpack.c.h.b16 %v156
    %v247 = vunpack.c.l.b16 %v157
    %v248 = vunpack.c.h.b16 %v157
    %v249 = vunpack.c.l.b16 %v158
    %v250 = vunpack.c.h.b16 %v158
    %v251 = vunpack.c.l.b16 %v159
    %v252 = vunpack.c.h.b16 %v159
    %v253 = vunpack.c.l.b16 %v160
    %v254 = vunpack.c.h.b16 %v160
    %v255 = vunpack.c.l.b16 %v161
    %v256 = vunpack.c.h.b16 %v161
    %v257 = vunpack.c.l.b16 %v162
    %v258 = vunpack.c.h.b16 %v162
    %v259 = vpack.c.b16 %v197, %v195
    %v260 = vpack.c.b16 %v198, %v196
    %v261 = vpack.c.b16 %v201, %v199
    %v262 = vpack.c.b16 %v202, %v200
    %v263 = vpack.c.b16 %v205, %v203
    %v264 = vpack.c.b16 %v206, %v204
    %v265 = vpack.c.b16 %v209, %v207
    %v266 = vpack.c.b16 %v210, %v208
    %v267 = vpack.c.b16 %v213, %v211
    %v268 = vpack.c.b16 %v214, %v212
    %v269 = vpack.c.b16 %v217, %v215
    %v270 = vpack.c.b16 %v218, %v216
    %v271 = vpack.c.b16 %v221, %v219
    %v272 = vpack.c.b16 %v222, %v220
    %v273 = vpack.c.b16 %v225, %v223
    %v274 = vpack.c.b16 %v226, %v224
    %v275 = vpack.c.b16 %v229, %v227
    %v276 = vpack.c.b16 %v230, %v228
    %v277 = vpack.c.b16 %v233, %v231
    %v278 = vpack.c.b16 %v234, %v232
    %v279 = vpack.c.b16 %v237, %v235
    %v280 = vpack.c.b16 %v238, %v236
    %v281 = vpack.c.b16 %v241, %v239
    %v282 = vpack.c.b16 %v242, %v240
    %v283 = vpack.c.b16 %v245, %v243
    %v284 = vpack.c.b16 %v246, %v244
    %v285 = vpack.c.b16 %v249, %v247
    %v286 = vpack.c.b16 %v250, %v248
    %v287 = vpack.c.b16 %v253, %v251
    %v288 = vpack.c.b16 %v254, %v252
    %v289 = vpack.c.b16 %v257, %v255
    %v290 = vpack.c.b16 %v258, %v256
    %v355 = vunpack.c.l.b16 %v67
    %v356 = vunpack.c.l.b16 %v68
    %v357 = vunpack.c.l.b16 %v69
    %v358 = vunpack.c.l.b16 %v70
    %v359 = vunpack.c.l.b16 %v71
    %v360 = vunpack.c.l.b16 %v72
    %v361 = vunpack.c.l.b16 %v73
    %v362 = vunpack.c.l.b16 %v74
    %v363 = vunpack.c.l.b16 %v75
    %v364 = vunpack.c.l.b16 %v76
    %v365 = vunpack.c.l.b16 %v77
    %v366 = vunpack.c.l.b16 %v78
    %v367 = vunpack.c.l.b16 %v79
    %v368 = vunpack.c.l.b16 %v80
    %v369 = vunpack.c.l.b16 %v81
    %v370 = vunpack.c.l.b16 %v82
    %v371 = vunpack.c.l.b16 %v83
    %v372 = vunpack.c.l.b16 %v84
    %v373 = vunpack.c.l.b16 %v85
    %v374 = vunpack.c.l.b16 %v86
    %v375 = vunpack.c.l.b16 %v87
    %v376 = vunpack.c.l.b16 %v88
    %v377 = vunpack.c.l.b16 %v89
    %v378 = vunpack.c.l.b16 %v90
    %v379 = vunpack.c.l.b16 %v91
    %v380 = vunpack.c.l.b16 %v92
    %v381 = vunpack.c.l.b16 %v93
    %v382 = vunpack.c.l.b16 %v94
    %v383 = vunpack.c.l.b16 %v95
    %v384 = vunpack.c.l.b16 %v96
    %v385 = vunpack.c.l.b16 %v97
    %v386 = vunpack.c.l.b16 %v98
    %v387 = vpack.c.b16 %v356, %v355
    %v388 = vpack.c.b16 %v358, %v357
    %v389 = vpack.c.b16 %v360, %v359
    %v390 = vpack.c.b16 %v362, %v361
    %v391 = vpack.c.b16 %v364, %v363
    %v392 = vpack.c.b16 %v366, %v365
    %v393 = vpack.c.b16 %v368, %v367
    %v394 = vpack.c.b16 %v370, %v369
    %v395 = vpack.c.b16 %v372, %v371
    %v396 = vpack.c.b16 %v374, %v373
    %v397 = vpack.c.b16 %v376, %v375
    %v398 = vpack.c.b16 %v378, %v377
    %v399 = vpack.c.b16 %v380, %v379
    %v400 = vpack.c.b16 %v382, %v381
    %v401 = vpack.c.b16 %v384, %v383
    %v402 = vpack.c.b16 %v386, %v385
    %419 = vmatprep.subr.bf16.mxu0 0
    %420 = vmatpush1.bf16.msra.mxu0 %v394
    %421 = vmatprep.subr.bf16.mxu0 0
    %422 = vmatpush1.bf16.msra.mxu0 %v393
    %423 = vmatprep.subr.bf16.mxu0 0
    %424 = vmatpush1.bf16.msra.mxu0 %v392
    %425 = vmatprep.subr.bf16.mxu0 0
    %426 = vmatpush1.bf16.msra.mxu0 %v391
    %427 = vmatprep.subr.bf16.mxu0 0
    %428 = vmatpush1.bf16.msra.mxu0 %v390
    %429 = vmatprep.subr.bf16.mxu0 0
    %430 = vmatpush1.bf16.msra.mxu0 %v389
    %431 = vmatprep.subr.bf16.mxu0 0
    %432 = vmatpush1.bf16.msra.mxu0 %v388
    %433 = vmatprep.subr.bf16.mxu0 0
    %434 = vmatpush1.bf16.msra.mxu0 %v387
    %435 = vmatprep.subr.bf16.mxu0 0
    %436 = vmatpush2.bf16.msra.mxu0 %v402
    %437 = vmatprep.subr.bf16.mxu0 0
    %438 = vmatpush2.bf16.msra.mxu0 %v401
    %439 = vmatprep.subr.bf16.mxu0 0
    %440 = vmatpush2.bf16.msra.mxu0 %v400
    %441 = vmatprep.subr.bf16.mxu0 0
    %442 = vmatpush2.bf16.msra.mxu0 %v399
    %443 = vmatprep.subr.bf16.mxu0 0
    %444 = vmatpush2.bf16.msra.mxu0 %v398
    %445 = vmatprep.subr.bf16.mxu0 0
    %446 = vmatpush2.bf16.msra.mxu0 %v397
    %447 = vmatprep.subr.bf16.mxu0 0
    %448 = vmatpush2.bf16.msra.mxu0 %v396
    %449 = vmatprep.subr.bf16.mxu0 0
    %450 = vmatpush2.bf16.msra.mxu0 %v395
    %451 = vmatprep.mubr.bf16.mxu0 %v260
    %452 = vmatmul.mubr.bf16.gmra.mxu0 %v259
    %v453 = vpop.f32.mrf.mxu0
    %v454 = vadd.f32 0.0, %v453
    %v455 = vpop.f32.mrf.mxu0
    %v456 = vpop.f32.mrf.mxu0
    %v457 = vadd.f32 0.0, %v456
    %v458 = vpop.f32.mrf.mxu0
    %459 = vmatprep.mubr.bf16.mxu0 %v262
    %460 = vmatmul.mubr.bf16.gmra.mxu0 %v261
    %v461 = vpop.f32.mrf.mxu0
    %v462 = vadd.f32 0.0, %v461
    %v463 = vpop.f32.mrf.mxu0
    %v464 = vpop.f32.mrf.mxu0
    %v465 = vadd.f32 0.0, %v464
    %v466 = vpop.f32.mrf.mxu0
    %467 = vmatprep.mubr.bf16.mxu0 %v264
    %468 = vmatmul.mubr.bf16.gmra.mxu0 %v263
    %v469 = vpop.f32.mrf.mxu0
    %v470 = vadd.f32 0.0, %v469
    %v471 = vpop.f32.mrf.mxu0
    %v472 = vpop.f32.mrf.mxu0
    %v473 = vadd.f32 0.0, %v472
    %v474 = vpop.f32.mrf.mxu0
    %475 = vmatprep.mubr.bf16.mxu0 %v266
    %476 = vmatmul.mubr.bf16.gmra.mxu0 %v265
    %v477 = vpop.f32.mrf.mxu0
    %v478 = vadd.f32 0.0, %v477
    %v479 = vpop.f32.mrf.mxu0
    %v480 = vpop.f32.mrf.mxu0
    %v481 = vadd.f32 0.0, %v480
    %v482 = vpop.f32.mrf.mxu0
    %483 = vmatprep.mubr.bf16.mxu0 %v268
    %484 = vmatmul.mubr.bf16.gmra.mxu0 %v267
    %v485 = vpop.f32.mrf.mxu0
    %v486 = vadd.f32 0.0, %v485
    %v487 = vpop.f32.mrf.mxu0
    %v488 = vpop.f32.mrf.mxu0
    %v489 = vadd.f32 0.0, %v488
    %v490 = vpop.f32.mrf.mxu0
    %491 = vmatprep.mubr.bf16.mxu0 %v270
    %492 = vmatmul.mubr.bf16.gmra.mxu0 %v269
    %v493 = vpop.f32.mrf.mxu0
    %v494 = vadd.f32 0.0, %v493
    %v495 = vpop.f32.mrf.mxu0
    %v496 = vpop.f32.mrf.mxu0
    %v497 = vadd.f32 0.0, %v496
    %v498 = vpop.f32.mrf.mxu0
    %499 = vmatprep.mubr.bf16.mxu0 %v272
    %500 = vmatmul.mubr.bf16.gmra.mxu0 %v271
    %v501 = vpop.f32.mrf.mxu0
    %v502 = vadd.f32 0.0, %v501
    %v503 = vpop.f32.mrf.mxu0
    %v504 = vpop.f32.mrf.mxu0
    %v505 = vadd.f32 0.0, %v504
    %v506 = vpop.f32.mrf.mxu0
    %507 = vmatprep.mubr.bf16.mxu0 %v274
    %508 = vmatmul.mubr.bf16.gmra.mxu0 %v273
    %v509 = vpop.f32.mrf.mxu0
    %v510 = vadd.f32 0.0, %v509
    %v511 = vpop.f32.mrf.mxu0
    %v512 = vpop.f32.mrf.mxu0
    %v513 = vadd.f32 0.0, %v512
    %v514 = vpop.f32.mrf.mxu0
    %515 = vmatprep.mubr.bf16.mxu0 %v276
    %516 = vmatmul.mubr.bf16.gmra.mxu0 %v275
    %v517 = vpop.f32.mrf.mxu0
    %v518 = vadd.f32 0.0, %v517
    %v519 = vpop.f32.mrf.mxu0
    %v520 = vpop.f32.mrf.mxu0
    %v521 = vadd.f32 0.0, %v520
    %v522 = vpop.f32.mrf.mxu0
    %523 = vmatprep.mubr.bf16.mxu0 %v278
    %524 = vmatmul.mubr.bf16.gmra.mxu0 %v277
    %v525 = vpop.f32.mrf.mxu0
    %v526 = vadd.f32 0.0, %v525
    %v527 = vpop.f32.mrf.mxu0
    %v528 = vpop.f32.mrf.mxu0
    %v529 = vadd.f32 0.0, %v528
    %v530 = vpop.f32.mrf.mxu0
    %531 = vmatprep.mubr.bf16.mxu0 %v280
    %532 = vmatmul.mubr.bf16.gmra.mxu0 %v279
    %v533 = vpop.f32.mrf.mxu0
    %v534 = vadd.f32 0.0, %v533
    %v535 = vpop.f32.mrf.mxu0
    %v536 = vpop.f32.mrf.mxu0
    %v537 = vadd.f32 0.0, %v536
    %v538 = vpop.f32.mrf.mxu0
    %539 = vmatprep.mubr.bf16.mxu0 %v282
    %540 = vmatmul.mubr.bf16.gmra.mxu0 %v281
    %v541 = vpop.f32.mrf.mxu0
    %v542 = vadd.f32 0.0, %v541
    %v543 = vpop.f32.mrf.mxu0
    %v544 = vpop.f32.mrf.mxu0
    %v545 = vadd.f32 0.0, %v544
    %v546 = vpop.f32.mrf.mxu0
    %547 = vmatprep.mubr.bf16.mxu0 %v284
    %548 = vmatmul.mubr.bf16.gmra.mxu0 %v283
    %v549 = vpop.f32.mrf.mxu0
    %v550 = vadd.f32 0.0, %v549
    %v551 = vpop.f32.mrf.mxu0
    %v552 = vpop.f32.mrf.mxu0
    %v553 = vadd.f32 0.0, %v552
    %v554 = vpop.f32.mrf.mxu0
    %555 = vmatprep.mubr.bf16.mxu0 %v286
    %556 = vmatmul.mubr.bf16.gmra.mxu0 %v285
    %v557 = vpop.f32.mrf.mxu0
    %v558 = vadd.f32 0.0, %v557
    %v559 = vpop.f32.mrf.mxu0
    %v560 = vpop.f32.mrf.mxu0
    %v561 = vadd.f32 0.0, %v560
    %v562 = vpop.f32.mrf.mxu0
    %563 = vmatprep.mubr.bf16.mxu0 %v288
    %564 = vmatmul.mubr.bf16.gmra.mxu0 %v287
    %v565 = vpop.f32.mrf.mxu0
    %v566 = vadd.f32 0.0, %v565
    %v567 = vpop.f32.mrf.mxu0
    %v568 = vpop.f32.mrf.mxu0
    %v569 = vadd.f32 0.0, %v568
    %v570 = vpop.f32.mrf.mxu0
    %571 = vmatprep.mubr.bf16.mxu0 %v290
    %572 = vmatmul.mubr.bf16.gmra.mxu0 %v289
    %v573 = vpop.f32.mrf.mxu0
    %v574 = vadd.f32 0.0, %v573
    %v575 = vpop.f32.mrf.mxu0
    %v576 = vpop.f32.mrf.mxu0
    %v577 = vadd.f32 0.0, %v576
    %v578 = vpop.f32.mrf.mxu0
    %579 = vdwg.mxu0
    %v580 = vadd.f32 %v99, %v454
    %v581 = vadd.f32 %v100, %v457
    %v582 = vadd.f32 %v101, %v462
    %v583 = vadd.f32 %v102, %v465
    %v584 = vadd.f32 %v103, %v470
    %v585 = vadd.f32 %v104, %v473
    %v586 = vadd.f32 %v105, %v478
    %v587 = vadd.f32 %v106, %v481
    %v588 = vadd.f32 %v107, %v486
    %v589 = vadd.f32 %v108, %v489
    %v590 = vadd.f32 %v109, %v494
    %v591 = vadd.f32 %v110, %v497
    %v592 = vadd.f32 %v111, %v502
    %v593 = vadd.f32 %v112, %v505
    %v594 = vadd.f32 %v113, %v510
    %v595 = vadd.f32 %v114, %v513
    %v596 = vadd.f32 %v115, %v518
    %v597 = vadd.f32 %v116, %v521
    %v598 = vadd.f32 %v117, %v526
    %v599 = vadd.f32 %v118, %v529
    %v600 = vadd.f32 %v119, %v534
    %v601 = vadd.f32 %v120, %v537
    %v602 = vadd.f32 %v121, %v542
    %v603 = vadd.f32 %v122, %v545
    %v604 = vadd.f32 %v123, %v550
    %v605 = vadd.f32 %v124, %v553
    %v606 = vadd.f32 %v125, %v558
    %v607 = vadd.f32 %v126, %v561
    %v608 = vadd.f32 %v127, %v566
    %v609 = vadd.f32 %v128, %v569
    %v610 = vadd.f32 %v129, %v574
    %v611 = vadd.f32 %v130, %v577
    %vm612 = vcmask 130048
    %613 = vst.msk [vmem:[#allocation2] sm:$0xff] %vm612, %v580
    %614 = vst.msk [vmem:[#allocation2 + $0x8] sm:$0xff] %vm612, %v581
    %615 = vst.msk [vmem:[#allocation2 + $0x10] sm:$0xff] %vm612, %v582
    %616 = vst.msk [vmem:[#allocation2 + $0x18] sm:$0xff] %vm612, %v583
    %617 = vst.msk [vmem:[#allocation2 + $0x20] sm:$0xff] %vm612, %v584
    %618 = vst.msk [vmem:[#allocation2 + $0x28] sm:$0xff] %vm612, %v585
    %619 = vst.msk [vmem:[#allocation2 + $0x30] sm:$0xff] %vm612, %v586
    %620 = vst.msk [vmem:[#allocation2 + $0x38] sm:$0xff] %vm612, %v587
    %621 = vst.msk [vmem:[#allocation2 + $0x40] sm:$0xff] %vm612, %v588
    %622 = vst.msk [vmem:[#allocation2 + $0x48] sm:$0xff] %vm612, %v589
    %623 = vst.msk [vmem:[#allocation2 + $0x50] sm:$0xff] %vm612, %v590
    %624 = vst.msk [vmem:[#allocation2 + $0x58] sm:$0xff] %vm612, %v591
    %625 = vst.msk [vmem:[#allocation2 + $0x60] sm:$0xff] %vm612, %v592
    %626 = vst.msk [vmem:[#allocation2 + $0x68] sm:$0xff] %vm612, %v593
    %627 = vst.msk [vmem:[#allocation2 + $0x70] sm:$0xff] %vm612, %v594
    %628 = vst.msk [vmem:[#allocation2 + $0x78] sm:$0xff] %vm612, %v595
    %629 = vst.msk [vmem:[#allocation2 + $0x80] sm:$0xff] %vm612, %v596
    %630 = vst.msk [vmem:[#allocation2 + $0x88] sm:$0xff] %vm612, %v597
    %631 = vst.msk [vmem:[#allocation2 + $0x90] sm:$0xff] %vm612, %v598
    %632 = vst.msk [vmem:[#allocation2 + $0x98] sm:$0xff] %vm612, %v599
    %633 = vst.msk [vmem:[#allocation2 + $0xa0] sm:$0xff] %vm612, %v600
    %634 = vst.msk [vmem:[#allocation2 + $0xa8] sm:$0xff] %vm612, %v601
    %635 = vst.msk [vmem:[#allocation2 + $0xb0] sm:$0xff] %vm612, %v602
    %636 = vst.msk [vmem:[#allocation2 + $0xb8] sm:$0xff] %vm612, %v603
    %637 = vst.msk [vmem:[#allocation2 + $0xc0] sm:$0xff] %vm612, %v604
    %638 = vst.msk [vmem:[#allocation2 + $0xc8] sm:$0xff] %vm612, %v605
    %639 = vst.msk [vmem:[#allocation2 + $0xd0] sm:$0xff] %vm612, %v606
    %640 = vst.msk [vmem:[#allocation2 + $0xd8] sm:$0xff] %vm612, %v607
    %641 = vst.msk [vmem:[#allocation2 + $0xe0] sm:$0xff] %vm612, %v608
    %642 = vst.msk [vmem:[#allocation2 + $0xe8] sm:$0xff] %vm612, %v609
    %643 = vst.msk [vmem:[#allocation2 + $0xf0] sm:$0xff] %vm612, %v610
    %644 = vst.msk [vmem:[#allocation2 + $0xf8] sm:$0xff] %vm612, %v611
    // Predicated region
    $region30: #{tpu_custom_call.1} parent=1 // pred_check
      %p645 = pneg %p25
    $region31: #{tpu_custom_call.1} parent=1 // pred_check_branch
      %647 = sbr.rel (%p645) target = $region33
    $region32: #{tpu_custom_call.1} parent=1 // pred_region
      %v648 = vld [vmem:[%s1] sm:$0xff]
      %v649 = vld [vmem:[%s1 + $0x8] sm:$0xff]
      %v650 = vld [vmem:[%s1 + $0x10] sm:$0xff]
      %v651 = vld [vmem:[%s1 + $0x18] sm:$0xff]
      %v652 = vld [vmem:[%s1 + $0x20] sm:$0xff]
      %v653 = vld [vmem:[%s1 + $0x28] sm:$0xff]
      %v654 = vld [vmem:[%s1 + $0x30] sm:$0xff]
      %v655 = vld [vmem:[%s1 + $0x38] sm:$0xff]
      %v656 = vld [vmem:[%s1 + $0x40] sm:$0xff]
      %v657 = vld [vmem:[%s1 + $0x48] sm:$0xff]
      %v658 = vld [vmem:[%s1 + $0x50] sm:$0xff]
      %v659 = vld [vmem:[%s1 + $0x58] sm:$0xff]
      %v660 = vld [vmem:[%s1 + $0x60] sm:$0xff]
      %v661 = vld [vmem:[%s1 + $0x68] sm:$0xff]
      %v662 = vld [vmem:[%s1 + $0x70] sm:$0xff]
      %v663 = vld [vmem:[%s1 + $0x78] sm:$0xff]
      %v664 = vld [vmem:[%s1 + $0x80] sm:$0xff]
      %v665 = vld [vmem:[%s1 + $0x88] sm:$0xff]
      %v666 = vld [vmem:[%s1 + $0x90] sm:$0xff]
      %v667 = vld [vmem:[%s1 + $0x98] sm:$0xff]
      %v668 = vld [vmem:[%s1 + $0xa0] sm:$0xff]
      %v669 = vld [vmem:[%s1 + $0xa8] sm:$0xff]
      %v670 = vld [vmem:[%s1 + $0xb0] sm:$0xff]
      %v671 = vld [vmem:[%s1 + $0xb8] sm:$0xff]
      %v672 = vld [vmem:[%s1 + $0xc0] sm:$0xff]
      %v673 = vld [vmem:[%s1 + $0xc8] sm:$0xff]
      %v674 = vld [vmem:[%s1 + $0xd0] sm:$0xff]
      %v675 = vld [vmem:[%s1 + $0xd8] sm:$0xff]
      %v676 = vld [vmem:[%s1 + $0xe0] sm:$0xff]
      %v677 = vld [vmem:[%s1 + $0xe8] sm:$0xff]
      %v678 = vld [vmem:[%s1 + $0xf0] sm:$0xff]
      %v679 = vld [vmem:[%s1 + $0xf8] sm:$0xff]
      %v680 = vld [vmem:[#allocation2] sm:$0xff]
      %v681 = vld [vmem:[#allocation2 + $0x8] sm:$0xff]
      %v682 = vld [vmem:[#allocation2 + $0x10] sm:$0xff]
      %v683 = vld [vmem:[#allocation2 + $0x18] sm:$0xff]
      %v684 = vld [vmem:[#allocation2 + $0x20] sm:$0xff]
      %v685 = vld [vmem:[#allocation2 + $0x28] sm:$0xff]
      %v686 = vld [vmem:[#allocation2 + $0x30] sm:$0xff]
      %v687 = vld [vmem:[#allocation2 + $0x38] sm:$0xff]
      %v688 = vld [vmem:[#allocation2 + $0x40] sm:$0xff]
      %v689 = vld [vmem:[#allocation2 + $0x48] sm:$0xff]
      %v690 = vld [vmem:[#allocation2 + $0x50] sm:$0xff]
      %v691 = vld [vmem:[#allocation2 + $0x58] sm:$0xff]
      %v692 = vld [vmem:[#allocation2 + $0x60] sm:$0xff]
      %v693 = vld [vmem:[#allocation2 + $0x68] sm:$0xff]
      %v694 = vld [vmem:[#allocation2 + $0x70] sm:$0xff]
      %v695 = vld [vmem:[#allocation2 + $0x78] sm:$0xff]
      %v696 = vld [vmem:[#allocation2 + $0x80] sm:$0xff]
      %v697 = vld [vmem:[#allocation2 + $0x88] sm:$0xff]
      %v698 = vld [vmem:[#allocation2 + $0x90] sm:$0xff]
      %v699 = vld [vmem:[#allocation2 + $0x98] sm:$0xff]
      %v700 = vld [vmem:[#allocation2 + $0xa0] sm:$0xff]
      %v701 = vld [vmem:[#allocation2 + $0xa8] sm:$0xff]
      %v702 = vld [vmem:[#allocation2 + $0xb0] sm:$0xff]
      %v703 = vld [vmem:[#allocation2 + $0xb8] sm:$0xff]
      %v704 = vld [vmem:[#allocation2 + $0xc0] sm:$0xff]
      %v705 = vld [vmem:[#allocation2 + $0xc8] sm:$0xff]
      %v706 = vld [vmem:[#allocation2 + $0xd0] sm:$0xff]
      %v707 = vld [vmem:[#allocation2 + $0xd8] sm:$0xff]
      %v708 = vld [vmem:[#allocation2 + $0xe0] sm:$0xff]
      %v709 = vld [vmem:[#allocation2 + $0xe8] sm:$0xff]
      %v710 = vld [vmem:[#allocation2 + $0xf0] sm:$0xff]
      %v711 = vld [vmem:[#allocation2 + $0xf8] sm:$0xff]
      %713 = vset.pattern.permute.xlu0 0
      %714 = vperm.xlu0 %713, %v648
      %v715 = vpop.permute.xlu0 %714
      %718 = vset.pattern.permute.xlu0 0
      %719 = vperm.xlu0 %718, %v649
      %v720 = vpop.permute.xlu0 %719
      %723 = vset.pattern.permute.xlu0 0
      %724 = vperm.xlu0 %723, %v650
      %v725 = vpop.permute.xlu0 %724
      %728 = vset.pattern.permute.xlu0 0
      %729 = vperm.xlu0 %728, %v651
      %v730 = vpop.permute.xlu0 %729
      %733 = vset.pattern.permute.xlu0 0
      %734 = vperm.xlu0 %733, %v652
      %v735 = vpop.permute.xlu0 %734
      %738 = vset.pattern.permute.xlu0 0
      %739 = vperm.xlu0 %738, %v653
      %v740 = vpop.permute.xlu0 %739
      %743 = vset.pattern.permute.xlu0 0
      %744 = vperm.xlu0 %743, %v654
      %v745 = vpop.permute.xlu0 %744
      %748 = vset.pattern.permute.xlu0 0
      %749 = vperm.xlu0 %748, %v655
      %v750 = vpop.permute.xlu0 %749
      %753 = vset.pattern.permute.xlu0 0
      %754 = vperm.xlu0 %753, %v656
      %v755 = vpop.permute.xlu0 %754
      %758 = vset.pattern.permute.xlu0 0
      %759 = vperm.xlu0 %758, %v657
      %v760 = vpop.permute.xlu0 %759
      %763 = vset.pattern.permute.xlu0 0
      %764 = vperm.xlu0 %763, %v658
      %v765 = vpop.permute.xlu0 %764
      %768 = vset.pattern.permute.xlu0 0
      %769 = vperm.xlu0 %768, %v659
      %v770 = vpop.permute.xlu0 %769
      %773 = vset.pattern.permute.xlu0 0
      %774 = vperm.xlu0 %773, %v660
      %v775 = vpop.permute.xlu0 %774
      %778 = vset.pattern.permute.xlu0 0
      %779 = vperm.xlu0 %778, %v661
      %v780 = vpop.permute.xlu0 %779
      %783 = vset.pattern.permute.xlu0 0
      %784 = vperm.xlu0 %783, %v662
      %v785 = vpop.permute.xlu0 %784
      %788 = vset.pattern.permute.xlu0 0
      %789 = vperm.xlu0 %788, %v663
      %v790 = vpop.permute.xlu0 %789
      %793 = vset.pattern.permute.xlu0 0
      %794 = vperm.xlu0 %793, %v664
      %v795 = vpop.permute.xlu0 %794
      %798 = vset.pattern.permute.xlu0 0
      %799 = vperm.xlu0 %798, %v665
      %v800 = vpop.permute.xlu0 %799
      %803 = vset.pattern.permute.xlu0 0
      %804 = vperm.xlu0 %803, %v666
      %v805 = vpop.permute.xlu0 %804
      %808 = vset.pattern.permute.xlu0 0
      %809 = vperm.xlu0 %808, %v667
      %v810 = vpop.permute.xlu0 %809
      %813 = vset.pattern.permute.xlu0 0
      %814 = vperm.xlu0 %813, %v668
      %v815 = vpop.permute.xlu0 %814
      %818 = vset.pattern.permute.xlu0 0
      %819 = vperm.xlu0 %818, %v669
      %v820 = vpop.permute.xlu0 %819
      %823 = vset.pattern.permute.xlu0 0
      %824 = vperm.xlu0 %823, %v670
      %v825 = vpop.permute.xlu0 %824
      %828 = vset.pattern.permute.xlu0 0
      %829 = vperm.xlu0 %828, %v671
      %v830 = vpop.permute.xlu0 %829
      %833 = vset.pattern.permute.xlu0 0
      %834 = vperm.xlu0 %833, %v672
      %v835 = vpop.permute.xlu0 %834
      %838 = vset.pattern.permute.xlu0 0
      %839 = vperm.xlu0 %838, %v673
      %v840 = vpop.permute.xlu0 %839
      %843 = vset.pattern.permute.xlu0 0
      %844 = vperm.xlu0 %843, %v674
      %v845 = vpop.permute.xlu0 %844
      %848 = vset.pattern.permute.xlu0 0
      %849 = vperm.xlu0 %848, %v675
      %v850 = vpop.permute.xlu0 %849
      %853 = vset.pattern.permute.xlu0 0
      %854 = vperm.xlu0 %853, %v676
      %v855 = vpop.permute.xlu0 %854
      %858 = vset.pattern.permute.xlu0 0
      %859 = vperm.xlu0 %858, %v677
      %v860 = vpop.permute.xlu0 %859
      %863 = vset.pattern.permute.xlu0 0
      %864 = vperm.xlu0 %863, %v678
      %v865 = vpop.permute.xlu0 %864
      %868 = vset.pattern.permute.xlu0 0
      %869 = vperm.xlu0 %868, %v679
      %v870 = vpop.permute.xlu0 %869
      %v872 = vmul.f32 %v715, %v680
      %v873 = vmul.f32 %v720, %v681
      %v874 = vmul.f32 %v725, %v682
      %v875 = vmul.f32 %v730, %v683
      %v876 = vmul.f32 %v735, %v684
      %v877 = vmul.f32 %v740, %v685
      %v878 = vmul.f32 %v745, %v686
      %v879 = vmul.f32 %v750, %v687
      %v880 = vmul.f32 %v755, %v688
      %v881 = vmul.f32 %v760, %v689
      %v882 = vmul.f32 %v765, %v690
      %v883 = vmul.f32 %v770, %v691
      %v884 = vmul.f32 %v775, %v692
      %v885 = vmul.f32 %v780, %v693
      %v886 = vmul.f32 %v785, %v694
      %v887 = vmul.f32 %v790, %v695
      %v888 = vmul.f32 %v795, %v696
      %v889 = vmul.f32 %v800, %v697
      %v890 = vmul.f32 %v805, %v698
      %v891 = vmul.f32 %v810, %v699
      %v892 = vmul.f32 %v815, %v700
      %v893 = vmul.f32 %v820, %v701
      %v894 = vmul.f32 %v825, %v702
      %v895 = vmul.f32 %v830, %v703
      %v896 = vmul.f32 %v835, %v704
      %v897 = vmul.f32 %v840, %v705
      %v898 = vmul.f32 %v845, %v706
      %v899 = vmul.f32 %v850, %v707
      %v900 = vmul.f32 %v855, %v708
      %v901 = vmul.f32 %v860, %v709
      %v902 = vmul.f32 %v865, %v710
      %v903 = vmul.f32 %v870, %v711
      %v904 = vpack.c.bf16 %v873, %v872
      %v905 = vpack.c.bf16 %v875, %v874
      %v906 = vpack.c.bf16 %v877, %v876
      %v907 = vpack.c.bf16 %v879, %v878
      %v908 = vpack.c.bf16 %v881, %v880
      %v909 = vpack.c.bf16 %v883, %v882
      %v910 = vpack.c.bf16 %v885, %v884
      %v911 = vpack.c.bf16 %v887, %v886
      %v912 = vpack.c.bf16 %v889, %v888
      %v913 = vpack.c.bf16 %v891, %v890
      %v914 = vpack.c.bf16 %v893, %v892
      %v915 = vpack.c.bf16 %v895, %v894
      %v916 = vpack.c.bf16 %v897, %v896
      %v917 = vpack.c.bf16 %v899, %v898
      %v918 = vpack.c.bf16 %v901, %v900
      %v919 = vpack.c.bf16 %v903, %v902
      %v920 = vld [vmem:[%s3] sm:$0xf]
      %v921 = vld [vmem:[%s3 + $0x4] sm:$0xf]
      %v922 = vld [vmem:[%s4] sm:$0x1]
      %v924 = vlaneseq
      %v925 = vshrl.u32 %v924, 7
      %v926 = vsub.s32 0, %v925
      %v927 = vrot.slane %v922, %v926
      %v931 = vunpack.c.l.b16 %v920
      %v932 = vunpack.c.l.b16 %v921
      %v933 = vpack.c.b16 %v932, %v931
      %v936 = vsel %vm612, %v904, 0
      %v939 = vsel %vm612, %v905, 0
      %v942 = vsel %vm612, %v906, 0
      %v945 = vsel %vm612, %v907, 0
      %v948 = vsel %vm612, %v908, 0
      %v951 = vsel %vm612, %v909, 0
      %v954 = vsel %vm612, %v910, 0
      %v957 = vsel %vm612, %v911, 0
      %v960 = vsel %vm612, %v912, 0
      %v963 = vsel %vm612, %v913, 0
      %v966 = vsel %vm612, %v914, 0
      %v969 = vsel %vm612, %v915, 0
      %v972 = vsel %vm612, %v916, 0
      %v975 = vsel %vm612, %v917, 0
      %v978 = vsel %vm612, %v918, 0
      %v981 = vsel %vm612, %v919, 0
      %983 = vmatprep.subr.bf16.mxu0 0
      %984 = vmatpush1.bf16.msra.mxu0 0
      %985 = vmatprep.subr.bf16.mxu0 0
      %986 = vmatpush1.bf16.msra.mxu0 0
      %987 = vmatprep.subr.bf16.mxu0 0
      %988 = vmatpush1.bf16.msra.mxu0 0
      %989 = vmatprep.subr.bf16.mxu0 0
      %990 = vmatpush1.bf16.msra.mxu0 0
      %991 = vmatprep.subr.bf16.mxu0 0
      %992 = vmatpush1.bf16.msra.mxu0 0
      %993 = vmatprep.subr.bf16.mxu0 0
      %994 = vmatpush1.bf16.msra.mxu0 0
      %995 = vmatprep.subr.bf16.mxu0 0
      %996 = vmatpush1.bf16.msra.mxu0 0
      %997 = vmatprep.subr.bf16.mxu0 0
      %998 = vmatpush1.bf16.msra.mxu0 %v933
      %999 = vmatprep.subr.bf16.mxu0 0
      %1000 = vmatpush2.bf16.msra.mxu0 0
      %1001 = vmatprep.subr.bf16.mxu0 0
      %1002 = vmatpush2.bf16.msra.mxu0 0
      %1003 = vmatprep.subr.bf16.mxu0 0
      %1004 = vmatpush2.bf16.msra.mxu0 0
      %1005 = vmatprep.subr.bf16.mxu0 0
      %1006 = vmatpush2.bf16.msra.mxu0 0
      %1007 = vmatprep.subr.bf16.mxu0 0
      %1008 = vmatpush2.bf16.msra.mxu0 0
      %1009 = vmatprep.subr.bf16.mxu0 0
      %1010 = vmatpush2.bf16.msra.mxu0 0
      %1011 = vmatprep.subr.bf16.mxu0 0
      %1012 = vmatpush2.bf16.msra.mxu0 0
      %1013 = vmatprep.subr.bf16.mxu0 0
      %1014 = vmatpush2.bf16.msra.mxu0 0
      %1015 = vmatprep.mubr.bf16.mxu0 0
      %1016 = vmatmul.mubr.bf16.gmra.mxu0 %v936
      %v1017 = vpop.f32.mrf.mxu0
      %v1018 = vadd.f32 %v927, %v1017
      %v1019 = vpop.f32.mrf.mxu0
      %v1020 = vpop.f32.mrf.mxu0
      %v1021 = vadd.f32 %v927, %v1020
      %v1022 = vpop.f32.mrf.mxu0
      %1023 = vmatprep.mubr.bf16.mxu0 0
      %1024 = vmatmul.mubr.bf16.gmra.mxu0 %v939
      %v1025 = vpop.f32.mrf.mxu0
      %v1026 = vadd.f32 %v927, %v1025
      %v1027 = vpop.f32.mrf.mxu0
      %v1028 = vpop.f32.mrf.mxu0
      %v1029 = vadd.f32 %v927, %v1028
      %v1030 = vpop.f32.mrf.mxu0
      %1031 = vmatprep.mubr.bf16.mxu0 0
      %1032 = vmatmul.mubr.bf16.gmra.mxu0 %v942
      %v1033 = vpop.f32.mrf.mxu0
      %v1034 = vadd.f32 %v927, %v1033
      %v1035 = vpop.f32.mrf.mxu0
      %v1036 = vpop.f32.mrf.mxu0
      %v1037 = vadd.f32 %v927, %v1036
      %v1038 = vpop.f32.mrf.mxu0
      %1039 = vmatprep.mubr.bf16.mxu0 0
      %1040 = vmatmul.mubr.bf16.gmra.mxu0 %v945
      %v1041 = vpop.f32.mrf.mxu0
      %v1042 = vadd.f32 %v927, %v1041
      %v1043 = vpop.f32.mrf.mxu0
      %v1044 = vpop.f32.mrf.mxu0
      %v1045 = vadd.f32 %v927, %v1044
      %v1046 = vpop.f32.mrf.mxu0
      %1047 = vmatprep.mubr.bf16.mxu0 0
      %1048 = vmatmul.mubr.bf16.gmra.mxu0 %v948
      %v1049 = vpop.f32.mrf.mxu0
      %v1050 = vadd.f32 %v927, %v1049
      %v1051 = vpop.f32.mrf.mxu0
      %v1052 = vpop.f32.mrf.mxu0
      %v1053 = vadd.f32 %v927, %v1052
      %v1054 = vpop.f32.mrf.mxu0
      %1055 = vmatprep.mubr.bf16.mxu0 0
      %1056 = vmatmul.mubr.bf16.gmra.mxu0 %v951
      %v1057 = vpop.f32.mrf.mxu0
      %v1058 = vadd.f32 %v927, %v1057
      %v1059 = vpop.f32.mrf.mxu0
      %v1060 = vpop.f32.mrf.mxu0
      %v1061 = vadd.f32 %v927, %v1060
      %v1062 = vpop.f32.mrf.mxu0
      %1063 = vmatprep.mubr.bf16.mxu0 0
      %1064 = vmatmul.mubr.bf16.gmra.mxu0 %v954
      %v1065 = vpop.f32.mrf.mxu0
      %v1066 = vadd.f32 %v927, %v1065
      %v1067 = vpop.f32.mrf.mxu0
      %v1068 = vpop.f32.mrf.mxu0
      %v1069 = vadd.f32 %v927, %v1068
      %v1070 = vpop.f32.mrf.mxu0
      %1071 = vmatprep.mubr.bf16.mxu0 0
      %1072 = vmatmul.mubr.bf16.gmra.mxu0 %v957
      %v1073 = vpop.f32.mrf.mxu0
      %v1074 = vadd.f32 %v927, %v1073
      %v1075 = vpop.f32.mrf.mxu0
      %v1076 = vpop.f32.mrf.mxu0
      %v1077 = vadd.f32 %v927, %v1076
      %v1078 = vpop.f32.mrf.mxu0
      %1079 = vmatprep.mubr.bf16.mxu0 0
      %1080 = vmatmul.mubr.bf16.gmra.mxu0 %v960
      %v1081 = vpop.f32.mrf.mxu0
      %v1082 = vadd.f32 %v927, %v1081
      %v1083 = vpop.f32.mrf.mxu0
      %v1084 = vpop.f32.mrf.mxu0
      %v1085 = vadd.f32 %v927, %v1084
      %v1086 = vpop.f32.mrf.mxu0
      %1087 = vmatprep.mubr.bf16.mxu0 0
      %1088 = vmatmul.mubr.bf16.gmra.mxu0 %v963
      %v1089 = vpop.f32.mrf.mxu0
      %v1090 = vadd.f32 %v927, %v1089
      %v1091 = vpop.f32.mrf.mxu0
      %v1092 = vpop.f32.mrf.mxu0
      %v1093 = vadd.f32 %v927, %v1092
      %v1094 = vpop.f32.mrf.mxu0
      %1095 = vmatprep.mubr.bf16.mxu0 0
      %1096 = vmatmul.mubr.bf16.gmra.mxu0 %v966
      %v1097 = vpop.f32.mrf.mxu0
      %v1098 = vadd.f32 %v927, %v1097
      %v1099 = vpop.f32.mrf.mxu0
      %v1100 = vpop.f32.mrf.mxu0
      %v1101 = vadd.f32 %v927, %v1100
      %v1102 = vpop.f32.mrf.mxu0
      %1103 = vmatprep.mubr.bf16.mxu0 0
      %1104 = vmatmul.mubr.bf16.gmra.mxu0 %v969
      %v1105 = vpop.f32.mrf.mxu0
      %v1106 = vadd.f32 %v927, %v1105
      %v1107 = vpop.f32.mrf.mxu0
      %v1108 = vpop.f32.mrf.mxu0
      %v1109 = vadd.f32 %v927, %v1108
      %v1110 = vpop.f32.mrf.mxu0
      %1111 = vmatprep.mubr.bf16.mxu0 0
      %1112 = vmatmul.mubr.bf16.gmra.mxu0 %v972
      %v1113 = vpop.f32.mrf.mxu0
      %v1114 = vadd.f32 %v927, %v1113
      %v1115 = vpop.f32.mrf.mxu0
      %v1116 = vpop.f32.mrf.mxu0
      %v1117 = vadd.f32 %v927, %v1116
      %v1118 = vpop.f32.mrf.mxu0
      %1119 = vmatprep.mubr.bf16.mxu0 0
      %1120 = vmatmul.mubr.bf16.gmra.mxu0 %v975
      %v1121 = vpop.f32.mrf.mxu0
      %v1122 = vadd.f32 %v927, %v1121
      %v1123 = vpop.f32.mrf.mxu0
      %v1124 = vpop.f32.mrf.mxu0
      %v1125 = vadd.f32 %v927, %v1124
      %v1126 = vpop.f32.mrf.mxu0
      %1127 = vmatprep.mubr.bf16.mxu0 0
      %1128 = vmatmul.mubr.bf16.gmra.mxu0 %v978
      %v1129 = vpop.f32.mrf.mxu0
      %v1130 = vadd.f32 %v927, %v1129
      %v1131 = vpop.f32.mrf.mxu0
      %v1132 = vpop.f32.mrf.mxu0
      %v1133 = vadd.f32 %v927, %v1132
      %v1134 = vpop.f32.mrf.mxu0
      %1135 = vmatprep.mubr.bf16.mxu0 0
      %1136 = vmatmul.mubr.bf16.gmra.mxu0 %v981
      %v1137 = vpop.f32.mrf.mxu0
      %v1138 = vadd.f32 %v927, %v1137
      %v1139 = vpop.f32.mrf.mxu0
      %v1140 = vpop.f32.mrf.mxu0
      %v1141 = vadd.f32 %v927, %v1140
      %v1142 = vpop.f32.mrf.mxu0
      %1143 = vdwg.mxu0
      %v1144 = vmax.f32 %v1018, 0.0
      %v1145 = vmax.f32 %v1021, 0.0
      %v1146 = vmax.f32 %v1026, 0.0
      %v1147 = vmax.f32 %v1029, 0.0
      %v1148 = vmax.f32 %v1034, 0.0
      %v1149 = vmax.f32 %v1037, 0.0
      %v1150 = vmax.f32 %v1042, 0.0
      %v1151 = vmax.f32 %v1045, 0.0
      %v1152 = vmax.f32 %v1050, 0.0
      %v1153 = vmax.f32 %v1053, 0.0
      %v1154 = vmax.f32 %v1058, 0.0
      %v1155 = vmax.f32 %v1061, 0.0
      %v1156 = vmax.f32 %v1066, 0.0
      %v1157 = vmax.f32 %v1069, 0.0
      %v1158 = vmax.f32 %v1074, 0.0
      %v1159 = vmax.f32 %v1077, 0.0
      %v1160 = vmax.f32 %v1082, 0.0
      %v1161 = vmax.f32 %v1085, 0.0
      %v1162 = vmax.f32 %v1090, 0.0
      %v1163 = vmax.f32 %v1093, 0.0
      %v1164 = vmax.f32 %v1098, 0.0
      %v1165 = vmax.f32 %v1101, 0.0
      %v1166 = vmax.f32 %v1106, 0.0
      %v1167 = vmax.f32 %v1109, 0.0
      %v1168 = vmax.f32 %v1114, 0.0
      %v1169 = vmax.f32 %v1117, 0.0
      %v1170 = vmax.f32 %v1122, 0.0
      %v1171 = vmax.f32 %v1125, 0.0
      %v1172 = vmax.f32 %v1130, 0.0
      %v1173 = vmax.f32 %v1133, 0.0
      %v1174 = vmax.f32 %v1138, 0.0
      %v1175 = vmax.f32 %v1141, 0.0
      %v1176 = vpack.c.bf16 %v1145, %v1144
      %v1177 = vpack.c.bf16 %v1147, %v1146
      %v1178 = vpack.c.bf16 %v1149, %v1148
      %v1179 = vpack.c.bf16 %v1151, %v1150
      %v1180 = vpack.c.bf16 %v1153, %v1152
      %v1181 = vpack.c.bf16 %v1155, %v1154
      %v1182 = vpack.c.bf16 %v1157, %v1156
      %v1183 = vpack.c.bf16 %v1159, %v1158
      %v1184 = vpack.c.bf16 %v1161, %v1160
      %v1185 = vpack.c.bf16 %v1163, %v1162
      %v1186 = vpack.c.bf16 %v1165, %v1164
      %v1187 = vpack.c.bf16 %v1167, %v1166
      %v1188 = vpack.c.bf16 %v1169, %v1168
      %v1189 = vpack.c.bf16 %v1171, %v1170
      %v1190 = vpack.c.bf16 %v1173, %v1172
      %v1191 = vpack.c.bf16 %v1175, %v1174
      %v1192 = vld [vmem:[%s5] sm:$0xf]
      %v1193 = vld [vmem:[%s5 + $0x4] sm:$0xf]
      %v1194 = vld [vmem:[%s5 + $0x8] sm:$0xf]
      %v1195 = vld [vmem:[%s5 + $0xc] sm:$0xf]
      %v1200 = vunpack.c.l.b16 %v1192
      %v1201 = vunpack.c.l.b16 %v1193
      %v1202 = vunpack.c.l.b16 %v1194
      %v1203 = vunpack.c.l.b16 %v1195
      %v1204 = vpack.c.b16 %v1201, %v1200
      %v1205 = vpack.c.b16 %v1203, %v1202
      %vm1208 = vcmask 261120
      %v1210 = vsel %vm1208, %v1176, 0
      %v1213 = vsel %vm1208, %v1177, 0
      %v1216 = vsel %vm1208, %v1178, 0
      %v1219 = vsel %vm1208, %v1179, 0
      %v1222 = vsel %vm1208, %v1180, 0
      %v1225 = vsel %vm1208, %v1181, 0
      %v1228 = vsel %vm1208, %v1182, 0
      %v1231 = vsel %vm1208, %v1183, 0
      %v1234 = vsel %vm1208, %v1184, 0
      %v1237 = vsel %vm1208, %v1185, 0
      %v1240 = vsel %vm1208, %v1186, 0
      %v1243 = vsel %vm1208, %v1187, 0
      %v1246 = vsel %vm1208, %v1188, 0
      %v1249 = vsel %vm1208, %v1189, 0
      %v1252 = vsel %vm1208, %v1190, 0
      %v1255 = vsel %vm1208, %v1191, 0
      %1257 = vmatprep.subr.bf16.mxu0 0
      %1258 = vmatpush1.bf16.msra.mxu0 0
      %1259 = vmatprep.subr.bf16.mxu0 0
      %1260 = vmatpush1.bf16.msra.mxu0 0
      %1261 = vmatprep.subr.bf16.mxu0 0
      %1262 = vmatpush1.bf16.msra.mxu0 0
      %1263 = vmatprep.subr.bf16.mxu0 0
      %1264 = vmatpush1.bf16.msra.mxu0 0
      %1265 = vmatprep.subr.bf16.mxu0 0
      %1266 = vmatpush1.bf16.msra.mxu0 0
      %1267 = vmatprep.subr.bf16.mxu0 0
      %1268 = vmatpush1.bf16.msra.mxu0 0
      %1269 = vmatprep.subr.bf16.mxu0 0
      %1270 = vmatpush1.bf16.msra.mxu0 %v1205
      %1271 = vmatprep.subr.bf16.mxu0 0
      %1272 = vmatpush1.bf16.msra.mxu0 %v1204
      %1273 = vmatprep.subr.bf16.mxu0 0
      %1274 = vmatpush2.bf16.msra.mxu0 0
      %1275 = vmatprep.subr.bf16.mxu0 0
      %1276 = vmatpush2.bf16.msra.mxu0 0
      %1277 = vmatprep.subr.bf16.mxu0 0
      %1278 = vmatpush2.bf16.msra.mxu0 0
      %1279 = vmatprep.subr.bf16.mxu0 0
      %1280 = vmatpush2.bf16.msra.mxu0 0
      %1281 = vmatprep.subr.bf16.mxu0 0
      %1282 = vmatpush2.bf16.msra.mxu0 0
      %1283 = vmatprep.subr.bf16.mxu0 0
      %1284 = vmatpush2.bf16.msra.mxu0 0
      %1285 = vmatprep.subr.bf16.mxu0 0
      %1286 = vmatpush2.bf16.msra.mxu0 0
      %1287 = vmatprep.subr.bf16.mxu0 0
      %1288 = vmatpush2.bf16.msra.mxu0 0
      %1289 = vmatprep.mubr.bf16.mxu0 0
      %1290 = vmatmul.mubr.bf16.gmra.mxu0 %v1210
      %v1291 = vpop.f32.mrf.mxu0
      %v1292 = vadd.f32 0.0, %v1291
      %v1293 = vpop.f32.mrf.mxu0
      %v1294 = vpop.f32.mrf.mxu0
      %v1295 = vadd.f32 0.0, %v1294
      %v1296 = vpop.f32.mrf.mxu0
      %1297 = vmatprep.mubr.bf16.mxu0 0
      %1298 = vmatmul.mubr.bf16.gmra.mxu0 %v1213
      %v1299 = vpop.f32.mrf.mxu0
      %v1300 = vadd.f32 0.0, %v1299
      %v1301 = vpop.f32.mrf.mxu0
      %v1302 = vpop.f32.mrf.mxu0
      %v1303 = vadd.f32 0.0, %v1302
      %v1304 = vpop.f32.mrf.mxu0
      %1305 = vmatprep.mubr.bf16.mxu0 0
      %1306 = vmatmul.mubr.bf16.gmra.mxu0 %v1216
      %v1307 = vpop.f32.mrf.mxu0
      %v1308 = vadd.f32 0.0, %v1307
      %v1309 = vpop.f32.mrf.mxu0
      %v1310 = vpop.f32.mrf.mxu0
      %v1311 = vadd.f32 0.0, %v1310
      %v1312 = vpop.f32.mrf.mxu0
      %1313 = vmatprep.mubr.bf16.mxu0 0
      %1314 = vmatmul.mubr.bf16.gmra.mxu0 %v1219
      %v1315 = vpop.f32.mrf.mxu0
      %v1316 = vadd.f32 0.0, %v1315
      %v1317 = vpop.f32.mrf.mxu0
      %v1318 = vpop.f32.mrf.mxu0
      %v1319 = vadd.f32 0.0, %v1318
      %v1320 = vpop.f32.mrf.mxu0
      %1321 = vmatprep.mubr.bf16.mxu0 0
      %1322 = vmatmul.mubr.bf16.gmra.mxu0 %v1222
      %v1323 = vpop.f32.mrf.mxu0
      %v1324 = vadd.f32 0.0, %v1323
      %v1325 = vpop.f32.mrf.mxu0
      %v1326 = vpop.f32.mrf.mxu0
      %v1327 = vadd.f32 0.0, %v1326
      %v1328 = vpop.f32.mrf.mxu0
      %1329 = vmatprep.mubr.bf16.mxu0 0
      %1330 = vmatmul.mubr.bf16.gmra.mxu0 %v1225
      %v1331 = vpop.f32.mrf.mxu0
      %v1332 = vadd.f32 0.0, %v1331
      %v1333 = vpop.f32.mrf.mxu0
      %v1334 = vpop.f32.mrf.mxu0
      %v1335 = vadd.f32 0.0, %v1334
      %v1336 = vpop.f32.mrf.mxu0
      %1337 = vmatprep.mubr.bf16.mxu0 0
      %1338 = vmatmul.mubr.bf16.gmra.mxu0 %v1228
      %v1339 = vpop.f32.mrf.mxu0
      %v1340 = vadd.f32 0.0, %v1339
      %v1341 = vpop.f32.mrf.mxu0
      %v1342 = vpop.f32.mrf.mxu0
      %v1343 = vadd.f32 0.0, %v1342
      %v1344 = vpop.f32.mrf.mxu0
      %1345 = vmatprep.mubr.bf16.mxu0 0
      %1346 = vmatmul.mubr.bf16.gmra.mxu0 %v1231
      %v1347 = vpop.f32.mrf.mxu0
      %v1348 = vadd.f32 0.0, %v1347
      %v1349 = vpop.f32.mrf.mxu0
      %v1350 = vpop.f32.mrf.mxu0
      %v1351 = vadd.f32 0.0, %v1350
      %v1352 = vpop.f32.mrf.mxu0
      %1353 = vmatprep.mubr.bf16.mxu0 0
      %1354 = vmatmul.mubr.bf16.gmra.mxu0 %v1234
      %v1355 = vpop.f32.mrf.mxu0
      %v1356 = vadd.f32 0.0, %v1355
      %v1357 = vpop.f32.mrf.mxu0
      %v1358 = vpop.f32.mrf.mxu0
      %v1359 = vadd.f32 0.0, %v1358
      %v1360 = vpop.f32.mrf.mxu0
      %1361 = vmatprep.mubr.bf16.mxu0 0
      %1362 = vmatmul.mubr.bf16.gmra.mxu0 %v1237
      %v1363 = vpop.f32.mrf.mxu0
      %v1364 = vadd.f32 0.0, %v1363
      %v1365 = vpop.f32.mrf.mxu0
      %v1366 = vpop.f32.mrf.mxu0
      %v1367 = vadd.f32 0.0, %v1366
      %v1368 = vpop.f32.mrf.mxu0
      %1369 = vmatprep.mubr.bf16.mxu0 0
      %1370 = vmatmul.mubr.bf16.gmra.mxu0 %v1240
      %v1371 = vpop.f32.mrf.mxu0
      %v1372 = vadd.f32 0.0, %v1371
      %v1373 = vpop.f32.mrf.mxu0
      %v1374 = vpop.f32.mrf.mxu0
      %v1375 = vadd.f32 0.0, %v1374
      %v1376 = vpop.f32.mrf.mxu0
      %1377 = vmatprep.mubr.bf16.mxu0 0
      %1378 = vmatmul.mubr.bf16.gmra.mxu0 %v1243
      %v1379 = vpop.f32.mrf.mxu0
      %v1380 = vadd.f32 0.0, %v1379
      %v1381 = vpop.f32.mrf.mxu0
      %v1382 = vpop.f32.mrf.mxu0
      %v1383 = vadd.f32 0.0, %v1382
      %v1384 = vpop.f32.mrf.mxu0
      %1385 = vmatprep.mubr.bf16.mxu0 0
      %1386 = vmatmul.mubr.bf16.gmra.mxu0 %v1246
      %v1387 = vpop.f32.mrf.mxu0
      %v1388 = vadd.f32 0.0, %v1387
      %v1389 = vpop.f32.mrf.mxu0
      %v1390 = vpop.f32.mrf.mxu0
      %v1391 = vadd.f32 0.0, %v1390
      %v1392 = vpop.f32.mrf.mxu0
      %1393 = vmatprep.mubr.bf16.mxu0 0
      %1394 = vmatmul.mubr.bf16.gmra.mxu0 %v1249
      %v1395 = vpop.f32.mrf.mxu0
      %v1396 = vadd.f32 0.0, %v1395
      %v1397 = vpop.f32.mrf.mxu0
      %v1398 = vpop.f32.mrf.mxu0
      %v1399 = vadd.f32 0.0, %v1398
      %v1400 = vpop.f32.mrf.mxu0
      %1401 = vmatprep.mubr.bf16.mxu0 0
      %1402 = vmatmul.mubr.bf16.gmra.mxu0 %v1252
      %v1403 = vpop.f32.mrf.mxu0
      %v1404 = vadd.f32 0.0, %v1403
      %v1405 = vpop.f32.mrf.mxu0
      %v1406 = vpop.f32.mrf.mxu0
      %v1407 = vadd.f32 0.0, %v1406
      %v1408 = vpop.f32.mrf.mxu0
      %1409 = vmatprep.mubr.bf16.mxu0 0
      %1410 = vmatmul.mubr.bf16.gmra.mxu0 %v1255
      %v1411 = vpop.f32.mrf.mxu0
      %v1412 = vadd.f32 0.0, %v1411
      %v1413 = vpop.f32.mrf.mxu0
      %v1414 = vpop.f32.mrf.mxu0
      %v1415 = vadd.f32 0.0, %v1414
      %v1416 = vpop.f32.mrf.mxu0
      %1417 = vdwg.mxu0
      %v1418 = vmul.f32 %v715, %v1292
      %v1419 = vmul.f32 %v720, %v1295
      %v1420 = vmul.f32 %v725, %v1300
      %v1421 = vmul.f32 %v730, %v1303
      %v1422 = vmul.f32 %v735, %v1308
      %v1423 = vmul.f32 %v740, %v1311
      %v1424 = vmul.f32 %v745, %v1316
      %v1425 = vmul.f32 %v750, %v1319
      %v1426 = vmul.f32 %v755, %v1324
      %v1427 = vmul.f32 %v760, %v1327
      %v1428 = vmul.f32 %v765, %v1332
      %v1429 = vmul.f32 %v770, %v1335
      %v1430 = vmul.f32 %v775, %v1340
      %v1431 = vmul.f32 %v780, %v1343
      %v1432 = vmul.f32 %v785, %v1348
      %v1433 = vmul.f32 %v790, %v1351
      %v1434 = vmul.f32 %v795, %v1356
      %v1435 = vmul.f32 %v800, %v1359
      %v1436 = vmul.f32 %v805, %v1364
      %v1437 = vmul.f32 %v810, %v1367
      %v1438 = vmul.f32 %v815, %v1372
      %v1439 = vmul.f32 %v820, %v1375
      %v1440 = vmul.f32 %v825, %v1380
      %v1441 = vmul.f32 %v830, %v1383
      %v1442 = vmul.f32 %v835, %v1388
      %v1443 = vmul.f32 %v840, %v1391
      %v1444 = vmul.f32 %v845, %v1396
      %v1445 = vmul.f32 %v850, %v1399
      %v1446 = vmul.f32 %v855, %v1404
      %v1447 = vmul.f32 %v860, %v1407
      %v1448 = vmul.f32 %v865, %v1412
      %v1449 = vmul.f32 %v870, %v1415
      %v1450 = vpack.c.bf16 %v1419, %v1418
      %v1451 = vpack.c.bf16 %v1421, %v1420
      %v1452 = vpack.c.bf16 %v1423, %v1422
      %v1453 = vpack.c.bf16 %v1425, %v1424
      %v1454 = vpack.c.bf16 %v1427, %v1426
      %v1455 = vpack.c.bf16 %v1429, %v1428
      %v1456 = vpack.c.bf16 %v1431, %v1430
      %v1457 = vpack.c.bf16 %v1433, %v1432
      %v1458 = vpack.c.bf16 %v1435, %v1434
      %v1459 = vpack.c.bf16 %v1437, %v1436
      %v1460 = vpack.c.bf16 %v1439, %v1438
      %v1461 = vpack.c.bf16 %v1441, %v1440
      %v1462 = vpack.c.bf16 %v1443, %v1442
      %v1463 = vpack.c.bf16 %v1445, %v1444
      %v1464 = vpack.c.bf16 %v1447, %v1446
      %v1465 = vpack.c.bf16 %v1449, %v1448
      %v1482 = vunpack.c.l.b16 %v1450
      %v1483 = vunpack.c.h.b16 %v1450
      %v1484 = vunpack.c.l.b16 %v1451
      %v1485 = vunpack.c.h.b16 %v1451
      %v1486 = vunpack.c.l.b16 %v1452
      %v1487 = vunpack.c.h.b16 %v1452
      %v1488 = vunpack.c.l.b16 %v1453
      %v1489 = vunpack.c.h.b16 %v1453
      %v1490 = vunpack.c.l.b16 %v1454
      %v1491 = vunpack.c.h.b16 %v1454
      %v1492 = vunpack.c.l.b16 %v1455
      %v1493 = vunpack.c.h.b16 %v1455
      %v1494 = vunpack.c.l.b16 %v1456
      %v1495 = vunpack.c.h.b16 %v1456
      %v1496 = vunpack.c.l.b16 %v1457
      %v1497 = vunpack.c.h.b16 %v1457
      %v1498 = vunpack.c.l.b16 %v1458
      %v1499 = vunpack.c.h.b16 %v1458
      %v1500 = vunpack.c.l.b16 %v1459
      %v1501 = vunpack.c.h.b16 %v1459
      %v1502 = vunpack.c.l.b16 %v1460
      %v1503 = vunpack.c.h.b16 %v1460
      %v1504 = vunpack.c.l.b16 %v1461
      %v1505 = vunpack.c.h.b16 %v1461
      %v1506 = vunpack.c.l.b16 %v1462
      %v1507 = vunpack.c.h.b16 %v1462
      %v1508 = vunpack.c.l.b16 %v1463
      %v1509 = vunpack.c.h.b16 %v1463
      %v1510 = vunpack.c.l.b16 %v1464
      %v1511 = vunpack.c.h.b16 %v1464
      %v1512 = vunpack.c.l.b16 %v1465
      %v1513 = vunpack.c.h.b16 %v1465
      %v1514 = vpack.c.b16 %v1482, %v1482
      %v1515 = vpack.c.b16 %v1483, %v1483
      %v1516 = vpack.c.b16 %v1484, %v1484
      %v1517 = vpack.c.b16 %v1485, %v1485
      %v1518 = vpack.c.b16 %v1486, %v1486
      %v1519 = vpack.c.b16 %v1487, %v1487
      %v1520 = vpack.c.b16 %v1488, %v1488
      %v1521 = vpack.c.b16 %v1489, %v1489
      %v1522 = vpack.c.b16 %v1490, %v1490
      %v1523 = vpack.c.b16 %v1491, %v1491
      %v1524 = vpack.c.b16 %v1492, %v1492
      %v1525 = vpack.c.b16 %v1493, %v1493
      %v1526 = vpack.c.b16 %v1494, %v1494
      %v1527 = vpack.c.b16 %v1495, %v1495
      %v1528 = vpack.c.b16 %v1496, %v1496
      %v1529 = vpack.c.b16 %v1497, %v1497
      %v1530 = vpack.c.b16 %v1498, %v1498
      %v1531 = vpack.c.b16 %v1499, %v1499
      %v1532 = vpack.c.b16 %v1500, %v1500
      %v1533 = vpack.c.b16 %v1501, %v1501
      %v1534 = vpack.c.b16 %v1502, %v1502
      %v1535 = vpack.c.b16 %v1503, %v1503
      %v1536 = vpack.c.b16 %v1504, %v1504
      %v1537 = vpack.c.b16 %v1505, %v1505
      %v1538 = vpack.c.b16 %v1506, %v1506
      %v1539 = vpack.c.b16 %v1507, %v1507
      %v1540 = vpack.c.b16 %v1508, %v1508
      %v1541 = vpack.c.b16 %v1509, %v1509
      %v1542 = vpack.c.b16 %v1510, %v1510
      %v1543 = vpack.c.b16 %v1511, %v1511
      %v1544 = vpack.c.b16 %v1512, %v1512
      %v1545 = vpack.c.b16 %v1513, %v1513
      %1578 = vst [vmem:[#allocation3] sm:$0xf] %v1514
      %1579 = vst [vmem:[#allocation3 + $0x4] sm:$0xf] %v1515
      %1580 = vst [vmem:[#allocation3 + $0x8] sm:$0xf] %v1516
      %1581 = vst [vmem:[#allocation3 + $0xc] sm:$0xf] %v1517
      %1582 = vst [vmem:[#allocation3 + $0x10] sm:$0xf] %v1518
      %1583 = vst [vmem:[#allocation3 + $0x14] sm:$0xf] %v1519
      %1584 = vst [vmem:[#allocation3 + $0x18] sm:$0xf] %v1520
      %1585 = vst [vmem:[#allocation3 + $0x1c] sm:$0xf] %v1521
      %1586 = vst [vmem:[#allocation3 + $0x20] sm:$0xf] %v1522
      %1587 = vst [vmem:[#allocation3 + $0x24] sm:$0xf] %v1523
      %1588 = vst [vmem:[#allocation3 + $0x28] sm:$0xf] %v1524
      %1589 = vst [vmem:[#allocation3 + $0x2c] sm:$0xf] %v1525
      %1590 = vst [vmem:[#allocation3 + $0x30] sm:$0xf] %v1526
      %1591 = vst [vmem:[#allocation3 + $0x34] sm:$0xf] %v1527
      %1592 = vst [vmem:[#allocation3 + $0x38] sm:$0xf] %v1528
      %1593 = vst [vmem:[#allocation3 + $0x3c] sm:$0xf] %v1529
      %1594 = vst [vmem:[#allocation3 + $0x40] sm:$0xf] %v1530
      %1595 = vst [vmem:[#allocation3 + $0x44] sm:$0xf] %v1531
      %1596 = vst [vmem:[#allocation3 + $0x48] sm:$0xf] %v1532
      %1597 = vst [vmem:[#allocation3 + $0x4c] sm:$0xf] %v1533
      %1598 = vst [vmem:[#allocation3 + $0x50] sm:$0xf] %v1534
      %1599 = vst [vmem:[#allocation3 + $0x54] sm:$0xf] %v1535
      %1600 = vst [vmem:[#allocation3 + $0x58] sm:$0xf] %v1536
      %1601 = vst [vmem:[#allocation3 + $0x5c] sm:$0xf] %v1537
      %1602 = vst [vmem:[#allocation3 + $0x60] sm:$0xf] %v1538
      %1603 = vst [vmem:[#allocation3 + $0x64] sm:$0xf] %v1539
      %1604 = vst [vmem:[#allocation3 + $0x68] sm:$0xf] %v1540
      %1605 = vst [vmem:[#allocation3 + $0x6c] sm:$0xf] %v1541
      %1606 = vst [vmem:[#allocation3 + $0x70] sm:$0xf] %v1542
      %1607 = vst [vmem:[#allocation3 + $0x74] sm:$0xf] %v1543
      %1608 = vst [vmem:[#allocation3 + $0x78] sm:$0xf] %v1544
      %1609 = vst [vmem:[#allocation3 + $0x7c] sm:$0xf] %v1545
    $region33: #{tpu_custom_call.1} parent=1 // pred_fallthru
      _
    // Predicated region
    $region34: #{tpu_custom_call.1} parent=1 // pred_check
      _
    $region35: #{tpu_custom_call.1} parent=1 // pred_check_branch
      %1611 = sbr.rel (0) target = $region37
    $region36: #{tpu_custom_call.1} parent=1 // pred_region
      %s1613 = ssub.s32 2048, 2048
      %1614 = vsyncadd [#allocation4], %s1613
      %s1615 = sshll.u32 [#allocation3], 4
      %s1616 = int_to_ptr.vmem [resolvable:$true] %s1615
      %1621 = dma.vmem_to_hbm [thread:$0]  %s1616, 2048, %s6, [#allocation4], 64, 64, 4
    $region37: #{tpu_custom_call.1} parent=1 // pred_fallthru
      _
    // Predicated region
    $region38: #{tpu_custom_call.1} parent=1 // pred_check
      _
    $region39: #{tpu_custom_call.1} parent=1 // pred_check_branch
      %1623 = sbr.rel (0) target = $region41
    $region40: #{tpu_custom_call.1} parent=1 // pred_region
      %1624 = dma.done [#allocation4], 2048
    $region41: #{tpu_custom_call.1} parent=1 // pred_fallthru
      _
    %1625 = vsyncpa [#allocation4], 1

</llo_original>
